<compile_context>
chip_gen: v7x
topology: tpu7x:2x2x1
jax: 0.10.0
libtpu: 0.0.40
codegen_flags: <defaults>
</compile_context>

<pallas_src>
import functools
import math

import jax
import jax.numpy as jnp
from jax.experimental import pallas as pl
from jax.experimental.pallas import tpu as pltpu

LN_EPS = 1e-5                      # PyTorch nn.LayerNorm default
_INV_SQRT2 = 0.7071067811865475    # 1/sqrt(2) for exact (erf) GELU
_SQRT_2_OVER_PI = 0.7978845608028654
_GELU_TANH_C = 0.044715


def _round_up(a, b):
    return (a + b - 1) // b * b


def _proto_interaction_kernel(x_ref, kT_ref, v_ref, gamma_ref, beta_ref,
                              wT_ref, bias_ref, o_ref, *, n_real, n_pad,
                              approximate_gelu):
    x = x_ref[...]                                       # (TM, D), caller dtype

    # attn_logits = features @ (scale * keys)^T  -> (TM, n_pad)
    # keys are pre-scaled and pre-transposed ONCE in the wrapper, so this is a
    # plain (TM,D)x(D,n_pad) MXU contraction with f32 accumulation.
    logits = jnp.dot(x, kT_ref[...], preferred_element_type=jnp.float32)

    # Mask the padded prototype columns (compile-time constant condition).
    if n_pad != n_real:
        col = jax.lax.broadcasted_iota(jnp.int32, logits.shape, 1)
        logits = jnp.where(col < n_real, logits, -1e30)

    # Softmax over the prototype axis.  Exact division: the divisor is a
    # (TM, 1) column, so there is nothing to gain from an approx reciprocal.
    m = jnp.max(logits, axis=-1, keepdims=True)
    e = jnp.exp(logits - m)
    attn = e / jnp.sum(e, axis=-1, keepdims=True)

    # normality_context = attn @ values  -> (TM, D), f32 accumulation.
    context = jnp.dot(attn.astype(v_ref.dtype), v_ref[...],
                      preferred_element_type=jnp.float32)

    # combined = 10*x + 5*context.  LayerNorm is scale-invariant, so feeding
    # (2*x + context) = combined/5 with eps/25 gives EXACTLY the same LN
    # output while saving one VALU multiply per element.
    combined = 2.0 * x.astype(jnp.float32) + context

    # LayerNorm over the feature dim (f32; gamma/beta kept in f32).
    mean = jnp.mean(combined, axis=-1, keepdims=True)
    centered = combined - mean
    var = jnp.mean(centered * centered, axis=-1, keepdims=True)
    normed = centered * jax.lax.rsqrt(var + LN_EPS / 25.0)
    normed = normed * gamma_ref[...] + beta_ref[...]

    # output_proj: y = normed @ W^T + b (W^T pre-transposed once in wrapper).
    proj = jnp.dot(normed.astype(wT_ref.dtype), wT_ref[...],
                   preferred_element_type=jnp.float32)
    proj = proj + bias_ref[...]

    if approximate_gelu:
        # tanh-GELU: tanh lowers to the (otherwise idle) EUP slot instead of a
        # ~20-op erf polynomial on the saturated VALU slot (v7x / bf16-v6e).
        inner = _SQRT_2_OVER_PI * (proj + _GELU_TANH_C * proj * proj * proj)
        act = 0.5 * proj * (1.0 + jnp.tanh(inner))
    else:
        # Exact GELU (PyTorch nn.GELU default): 0.5*x*(1 + erf(x/sqrt(2))).
        act = 0.5 * proj * (1.0 + jax.lax.erf(proj * _INV_SQRT2))

    # TODO(synk): dropout omitted — identity in eval/inference mode.
    o_ref[...] = act.astype(o_ref.dtype)


def prototype_interaction_layer(features, proto_keys, proto_values,
                                ln_gamma, ln_beta, proj_w, proj_b,
                                *, tile_m=1024, approximate_gelu=False):
    B, T, D = features.shape
    N = proto_keys.shape[0]
    M = B * T
    dtype = features.dtype
    itemsize = jnp.dtype(dtype).itemsize

    # ---- parameter prep (once, outside the hot loop) -----------------------
    scale = float(D) ** (-0.5)
    # dtype-aware sublane packing: 8 rows (4B), 16 rows (2B), 32 rows (1B).
    sub = max(8, 32 // itemsize)
    n_pad = max(sub, _round_up(N, sub))

    # Keys: scale folded in once, transposed once -> standard (K, N) operand.
    keys_t = (proto_keys.astype(jnp.float32) * scale).T.astype(dtype)   # (D, N)
    values = proto_values.astype(dtype)                                  # (N, D)
    if n_pad != N:
        keys_t = jnp.concatenate(
            [keys_t, jnp.zeros((D, n_pad - N), dtype)], axis=1)
        values = jnp.concatenate(
            [values, jnp.zeros((n_pad - N, D), dtype)], axis=0)

    w_t = proj_w.astype(dtype).T                            # (in, out), once
    gamma2d = ln_gamma.reshape(1, D).astype(jnp.float32)    # tiny params stay f32
    beta2d = ln_beta.reshape(1, D).astype(jnp.float32)
    bias2d = proj_b.reshape(1, D).astype(jnp.float32)

    # ---- generation-aware VMEM budget --------------------------------------
    try:
        vmem_cap = int(getattr(pltpu.get_tpu_info(), "vmem_capacity_bytes",
                               64 * 1024 * 1024))
    except Exception:
        vmem_cap = 64 * 1024 * 1024                # conservative (v7x) default
    vmem_budget = vmem_cap * 3 // 4                # ~96 MiB v5e/v6e, ~48 MiB v7x

    def _vmem_bytes(tm_):
        b = 2 * 2 * tm_ * D * itemsize             # x + out tiles, double-buffered
        b += 2 * (2 * n_pad * D + D * D) * itemsize  # keys^T, values, W (<=2 bufs)
        b += 2 * 3 * D * 4                         # gamma / beta / bias (f32)
        b += 6 * tm_ * D * 4 + 3 * tm_ * n_pad * 4  # live f32 intermediates
        return b

    # ---- row-tile selection: no wrapper-side padding in the common case ----
    cap = max(sub, _round_up(int(tile_m), sub))
    while cap > sub and _vmem_bytes(cap) > vmem_budget:
        cap = max(sub, _round_up(cap // 2, sub))

    M_pad = M
    cands = [d for d in range(sub, min(cap, M) + 1, sub) if M % d == 0]
    if cands:
        # Prefer >= 2 grid steps (v7x has 2 TensorCores), then an even number
        # of steps, then the largest tile (amortizes ~0.35us per-step cost).
        multi = [d for d in cands if M // d >= 2] or cands
        even = [d for d in multi if (M // d) % 2 == 0]
        tm = max(even) if even else max(multi)
    elif _vmem_bytes(M) <= vmem_budget:
        tm = M                                      # single full-extent block
    else:
        # Rare fallback: M is not a multiple of the sublane pack and too large
        # for one block -> minimal pad (common shapes never hit this path).
        M_pad = _round_up(M, sub)
        pads = [d for d in range(sub, min(cap, M_pad) + 1, sub)
                if M_pad % d == 0]
        tm = max(pads)

    x2d = features.reshape(M, D)
    if M_pad != M:
        x2d = jnp.concatenate([x2d, jnp.zeros((M_pad - M, D), dtype)], axis=0)

    kernel = functools.partial(_proto_interaction_kernel, n_real=N,
                               n_pad=n_pad, approximate_gelu=approximate_gelu)
    vmem_limit = int(min(vmem_cap, max(_vmem_bytes(tm) + (8 << 20), 32 << 20)))

    def _run(single_buffer_consts):
        def cspec(shape):
            # Constant-index operands are DMA'd once; a single VMEM buffer
            # suffices and reclaims the second pipeline buffer (v7x VMEM).
            if single_buffer_consts:
                return pl.BlockSpec(shape, lambda i: (0, 0),
                                    pipeline_mode=pl.Buffered(1))
            return pl.BlockSpec(shape, lambda i: (0, 0))

        return pl.pallas_call(
            kernel,
            out_shape=jax.ShapeDtypeStruct((M_pad, D), dtype),
            grid_spec=pltpu.PrefetchScalarGridSpec(
                num_scalar_prefetch=0,
                grid=(M_pad // tm,),
                in_specs=[
                    pl.BlockSpec((tm, D), lambda i: (i, 0)),   # feature rows
                    cspec((D, n_pad)),                         # scaled keys^T
                    cspec((n_pad, D)),                         # values
                    cspec((1, D)),                             # LN gamma (f32)
                    cspec((1, D)),                             # LN beta  (f32)
                    cspec((D, D)),                             # W^T (in, out)
                    cspec((1, D)),                             # bias (f32)
                ],
                out_specs=pl.BlockSpec((tm, D), lambda i: (i, 0)),
            ),
            compiler_params=pltpu.CompilerParams(
                dimension_semantics=("parallel",),
                vmem_limit_bytes=vmem_limit),
        )(x2d, keys_t, values, gamma2d, beta2d, w_t, bias2d)

    try:
        out2d = _run(True)
    except Exception:
        # pipeline_mode / Buffered(1) unsupported -> default double-buffering.
        out2d = _run(False)

    if M_pad != M:
        out2d = out2d[:M]
    return out2d.reshape(B, T, D)


def _reference(features, proto_keys, proto_values, ln_gamma, ln_beta,
               proj_w, proj_b, approximate_gelu=False):
    B, T, D = features.shape
    scale = float(D) ** (-0.5)
    logits = jnp.einsum("btd,nd->btn", features, proto_keys) * scale
    attn = jax.nn.softmax(logits, axis=-1)
    context = jnp.einsum("btn,nd->btd", attn, proto_values)
    combined = 10.0 * features + 5.0 * context
    mean = jnp.mean(combined, axis=-1, keepdims=True)
    var = jnp.mean((combined - mean) ** 2, axis=-1, keepdims=True)
    normed = (combined - mean) / jnp.sqrt(var + LN_EPS) * ln_gamma + ln_beta
    proj = jnp.einsum("btd,ed->bte", normed, proj_w) + proj_b
    return jax.nn.gelu(proj, approximate=approximate_gelu)


if __name__ == "__main__":
    # Small but lane-dense shapes consistent with the module (real default
    # feature_dim=512; D=128 keeps the output last dim a multiple of 128).
    B, T, D, N = 2, 8, 128, 5

    key = jax.random.PRNGKey(0)
    k_feat, k_pk, k_pv, k_w, k_b = jax.random.split(key, 5)

    features = jax.random.normal(k_feat, (B, T, D), dtype=jnp.float32)
    proto_keys = 0.02 * jax.random.normal(k_pk, (N, D), dtype=jnp.float32)
    proto_values = 0.02 * jax.random.normal(k_pv, (N, D), dtype=jnp.float32)
    ln_gamma = jnp.ones((D,), dtype=jnp.float32)
    ln_beta = jnp.zeros((D,), dtype=jnp.float32)
    bound = 1.0 / math.sqrt(D)
    proj_w = jax.random.uniform(k_w, (D, D), minval=-bound, maxval=bound,
                                dtype=jnp.float32)
    proj_b = jax.random.uniform(k_b, (D,), minval=-bound, maxval=bound,
                                dtype=jnp.float32)

    # f32 run with the exact (erf) GELU — bit-parity with nn.GELU() semantics.
    out = prototype_interaction_layer(features, proto_keys, proto_values,
                                      ln_gamma, ln_beta, proj_w, proj_b)
    out = jax.block_until_ready(out)
    ref = _reference(features, proto_keys, proto_values, ln_gamma, ln_beta,
                     proj_w, proj_b)
    assert out.shape == (B, T, D)
    assert jnp.allclose(out, ref, atol=1e-3, rtol=1e-3), "f32 mismatch vs ref"

    # bf16 activations/weights + tanh GELU (recommended on v7x / bf16-v6e
    # where the erf polynomial makes the kernel VALU-bound).  Checked against
    # the f32 reference with a relaxed tolerance.
    cast = lambda a: a.astype(jnp.bfloat16)
    out_bf16 = prototype_interaction_layer(
        cast(features), cast(proto_keys), cast(proto_values),
        cast(ln_gamma), cast(ln_beta), cast(proj_w), cast(proj_b),
        approximate_gelu=True)
    out_bf16 = jax.block_until_ready(out_bf16)
    assert out_bf16.shape == (B, T, D)
    assert out_bf16.dtype == jnp.bfloat16
    max_err = jnp.max(jnp.abs(out_bf16.astype(jnp.float32) - ref))
    assert bool(max_err < 6e-2), f"bf16 mismatch vs reference: {max_err}"

    print("KERNEL_OK")
</pallas_src>

<mosaic_0001>
module attributes {stable_mosaic.version = 11 : i64} {
  func.func @_proto_interaction_kernel(%arg0: i32, %arg1: memref<8x128xf32, #tpu.memory_space<vmem>>, %arg2: memref<128x8xf32, #tpu.memory_space<vmem>>, %arg3: memref<8x128xf32, #tpu.memory_space<vmem>>, %arg4: memref<1x128xf32, #tpu.memory_space<vmem>>, %arg5: memref<1x128xf32, #tpu.memory_space<vmem>>, %arg6: memref<128x128xf32, #tpu.memory_space<vmem>>, %arg7: memref<1x128xf32, #tpu.memory_space<vmem>>, %arg8: memref<8x128xf32, #tpu.memory_space<vmem>>) attributes {dimension_semantics = [#tpu.dimension_semantics<parallel>], iteration_bounds = array<i64: 2>, scalar_prefetch = 0 : i64, scratch_operands = 0 : i64, tpu.core_type = #tpu.core_type<tc>, window_params = [{transform_indices = @transform_0, window_bounds = array<i64: 8, 128>}, {pipeline_mode = #tpu.pipeline_mode<synchronous>, transform_indices = @transform_1, window_bounds = array<i64: 128, 8>}, {pipeline_mode = #tpu.pipeline_mode<synchronous>, transform_indices = @transform_2, window_bounds = array<i64: 8, 128>}, {pipeline_mode = #tpu.pipeline_mode<synchronous>, transform_indices = @transform_3, window_bounds = array<i64: 1, 128>}, {pipeline_mode = #tpu.pipeline_mode<synchronous>, transform_indices = @transform_4, window_bounds = array<i64: 1, 128>}, {pipeline_mode = #tpu.pipeline_mode<synchronous>, transform_indices = @transform_5, window_bounds = array<i64: 128, 128>}, {pipeline_mode = #tpu.pipeline_mode<synchronous>, transform_indices = @transform_6, window_bounds = array<i64: 1, 128>}, {transform_indices = @transform_7, window_bounds = array<i64: 8, 128>}]} {
    %c0 = arith.constant 0 : index
    %c0_0 = arith.constant 0 : index
    %0 = vector.load %arg1[%c0, %c0_0] : memref<8x128xf32, #tpu.memory_space<vmem>>, vector<8x128xf32>
    %c0_1 = arith.constant 0 : index
    %c0_2 = arith.constant 0 : index
    %1 = vector.load %arg2[%c0_1, %c0_2] : memref<128x8xf32, #tpu.memory_space<vmem>>, vector<128x8xf32>
    %cst = arith.constant dense<0.000000e+00> : vector<8x8xf32>
    %2 = tpu.matmul %0, %1, %cst {dimension_numbers = #tpu.dot_dimension_numbers<[1], [0], [0], [1], [0, 0, 1, 1], [], []>} : vector<8x128xf32>, vector<128x8xf32>, vector<8x8xf32> -> vector<8x8xf32>
    %3 = tpu.iota {dimensions = array<i32: 1>} : vector<8x8xi32>
    %c5_i32 = arith.constant 5 : i32
    %4 = vector.broadcast %c5_i32 : i32 to vector<8x8xi32>
    %5 = arith.cmpi slt, %3, %4 : vector<8x8xi32>
    %cst_3 = arith.constant -1.000000e+30 : f32
    %6 = vector.broadcast %cst_3 : f32 to vector<8x8xf32>
    %7 = arith.select %5, %2, %6 : vector<8x8xi1>, vector<8x8xf32>
    %cst_4 = arith.constant dense<0xFF800000> : vector<8xf32>
    %8 = vector.multi_reduction <maximumf>, %7, %cst_4 [1] : vector<8x8xf32> to vector<8xf32>
    %9 = vector.shape_cast %8 : vector<8xf32> to vector<8x1xf32>
    %10 = vector.broadcast %9 : vector<8x1xf32> to vector<8x8xf32>
    %11 = arith.subf %7, %10 : vector<8x8xf32>
    %12 = math.exp %11 : vector<8x8xf32>
    %cst_5 = arith.constant dense<0.000000e+00> : vector<8xf32>
    %13 = vector.multi_reduction <add>, %12, %cst_5 [1] : vector<8x8xf32> to vector<8xf32>
    %14 = vector.shape_cast %13 : vector<8xf32> to vector<8x1xf32>
    %15 = vector.broadcast %14 : vector<8x1xf32> to vector<8x8xf32>
    %16 = arith.divf %12, %15 : vector<8x8xf32>
    %c0_6 = arith.constant 0 : index
    %c0_7 = arith.constant 0 : index
    %17 = vector.load %arg3[%c0_6, %c0_7] : memref<8x128xf32, #tpu.memory_space<vmem>>, vector<8x128xf32>
    %cst_8 = arith.constant dense<0.000000e+00> : vector<8x128xf32>
    %18 = tpu.matmul %16, %17, %cst_8 {dimension_numbers = #tpu.dot_dimension_numbers<[1], [0], [0], [1], [0, 0, 1, 1], [], []>} : vector<8x8xf32>, vector<8x128xf32>, vector<8x128xf32> -> vector<8x128xf32>
    %cst_9 = arith.constant 2.000000e+00 : f32
    %19 = vector.broadcast %cst_9 : f32 to vector<8x128xf32>
    %20 = arith.mulf %19, %0 : vector<8x128xf32>
    %21 = arith.addf %20, %18 : vector<8x128xf32>
    %cst_10 = arith.constant dense<0.000000e+00> : vector<8xf32>
    %22 = vector.multi_reduction <add>, %21, %cst_10 [1] : vector<8x128xf32> to vector<8xf32>
    %23 = vector.shape_cast %22 : vector<8xf32> to vector<8x1xf32>
    %cst_11 = arith.constant 1.280000e+02 : f32
    %24 = vector.broadcast %cst_11 : f32 to vector<8x1xf32>
    %25 = arith.divf %23, %24 : vector<8x1xf32>
    %26 = vector.broadcast %25 : vector<8x1xf32> to vector<8x128xf32>
    %27 = arith.subf %21, %26 : vector<8x128xf32>
    %28 = arith.mulf %27, %27 : vector<8x128xf32>
    %cst_12 = arith.constant dense<0.000000e+00> : vector<8xf32>
    %29 = vector.multi_reduction <add>, %28, %cst_12 [1] : vector<8x128xf32> to vector<8xf32>
    %30 = vector.shape_cast %29 : vector<8xf32> to vector<8x1xf32>
    %cst_13 = arith.constant 1.280000e+02 : f32
    %31 = vector.broadcast %cst_13 : f32 to vector<8x1xf32>
    %32 = arith.divf %30, %31 : vector<8x1xf32>
    %cst_14 = arith.constant 4.000000e-07 : f32
    %33 = vector.broadcast %cst_14 : f32 to vector<8x1xf32>
    %34 = arith.addf %32, %33 : vector<8x1xf32>
    %35 = math.rsqrt %34 : vector<8x1xf32>
    %36 = vector.broadcast %35 : vector<8x1xf32> to vector<8x128xf32>
    %37 = arith.mulf %27, %36 : vector<8x128xf32>
    %c0_15 = arith.constant 0 : index
    %c0_16 = arith.constant 0 : index
    %38 = vector.load %arg4[%c0_15, %c0_16] : memref<1x128xf32, #tpu.memory_space<vmem>>, vector<1x128xf32>
    %39 = vector.broadcast %38 : vector<1x128xf32> to vector<8x128xf32>
    %40 = arith.mulf %37, %39 : vector<8x128xf32>
    %c0_17 = arith.constant 0 : index
    %c0_18 = arith.constant 0 : index
    %41 = vector.load %arg5[%c0_17, %c0_18] : memref<1x128xf32, #tpu.memory_space<vmem>>, vector<1x128xf32>
    %42 = vector.broadcast %41 : vector<1x128xf32> to vector<8x128xf32>
    %43 = arith.addf %40, %42 : vector<8x128xf32>
    %c0_19 = arith.constant 0 : index
    %c0_20 = arith.constant 0 : index
    %44 = vector.load %arg6[%c0_19, %c0_20] : memref<128x128xf32, #tpu.memory_space<vmem>>, vector<128x128xf32>
    %cst_21 = arith.constant dense<0.000000e+00> : vector<8x128xf32>
    %45 = tpu.matmul %43, %44, %cst_21 {dimension_numbers = #tpu.dot_dimension_numbers<[1], [0], [0], [1], [0, 0, 1, 1], [], []>} : vector<8x128xf32>, vector<128x128xf32>, vector<8x128xf32> -> vector<8x128xf32>
    %c0_22 = arith.constant 0 : index
    %c0_23 = arith.constant 0 : index
    %46 = vector.load %arg7[%c0_22, %c0_23] : memref<1x128xf32, #tpu.memory_space<vmem>>, vector<1x128xf32>
    %47 = vector.broadcast %46 : vector<1x128xf32> to vector<8x128xf32>
    %48 = arith.addf %45, %47 : vector<8x128xf32>
    %cst_24 = arith.constant 5.000000e-01 : f32
    %49 = vector.broadcast %cst_24 : f32 to vector<8x128xf32>
    %50 = arith.mulf %49, %48 : vector<8x128xf32>
    %cst_25 = arith.constant 0.707106769 : f32
    %51 = vector.broadcast %cst_25 : f32 to vector<8x128xf32>
    %52 = arith.mulf %48, %51 : vector<8x128xf32>
    %53 = math.erf %52 : vector<8x128xf32>
    %cst_26 = arith.constant 1.000000e+00 : f32
    %54 = vector.broadcast %cst_26 : f32 to vector<8x128xf32>
    %55 = arith.addf %54, %53 : vector<8x128xf32>
    %56 = arith.mulf %50, %55 : vector<8x128xf32>
    %c0_27 = arith.constant 0 : index
    %c0_28 = arith.constant 0 : index
    %57 = vector.load %arg8[%c0_27, %c0_28] : memref<8x128xf32, #tpu.memory_space<vmem>>, vector<8x128xf32>
    tpu.vector_store %arg8[%c0_27, %c0_28], %56 {strides = array<i32>} : memref<8x128xf32, #tpu.memory_space<vmem>>, vector<8x128xf32>,
    return
  }
  func.func @transform_0(%arg0: i32) -> (i32, i32) {
    %c0_i32 = arith.constant 0 : i32
    %c0_i32_0 = arith.constant 0 : i32
    return %arg0, %c0_i32 : i32, i32
  }
  func.func @transform_1(%arg0: i32) -> (i32, i32) {
    %c0_i32 = arith.constant 0 : i32
    %c0_i32_0 = arith.constant 0 : i32
    %c0_i32_1 = arith.constant 0 : i32
    return %c0_i32, %c0_i32_0 : i32, i32
  }
  func.func @transform_2(%arg0: i32) -> (i32, i32) {
    %c0_i32 = arith.constant 0 : i32
    %c0_i32_0 = arith.constant 0 : i32
    %c0_i32_1 = arith.constant 0 : i32
    return %c0_i32, %c0_i32_0 : i32, i32
  }
  func.func @transform_3(%arg0: i32) -> (i32, i32) {
    %c0_i32 = arith.constant 0 : i32
    %c0_i32_0 = arith.constant 0 : i32
    %c0_i32_1 = arith.constant 0 : i32
    return %c0_i32, %c0_i32_0 : i32, i32
  }
  func.func @transform_4(%arg0: i32) -> (i32, i32) {
    %c0_i32 = arith.constant 0 : i32
    %c0_i32_0 = arith.constant 0 : i32
    %c0_i32_1 = arith.constant 0 : i32
    return %c0_i32, %c0_i32_0 : i32, i32
  }
  func.func @transform_5(%arg0: i32) -> (i32, i32) {
    %c0_i32 = arith.constant 0 : i32
    %c0_i32_0 = arith.constant 0 : i32
    %c0_i32_1 = arith.constant 0 : i32
    return %c0_i32, %c0_i32_0 : i32, i32
  }
  func.func @transform_6(%arg0: i32) -> (i32, i32) {
    %c0_i32 = arith.constant 0 : i32
    %c0_i32_0 = arith.constant 0 : i32
    %c0_i32_1 = arith.constant 0 : i32
    return %c0_i32, %c0_i32_0 : i32, i32
  }
  func.func @transform_7(%arg0: i32) -> (i32, i32) {
    %c0_i32 = arith.constant 0 : i32
    %c0_i32_0 = arith.constant 0 : i32
    return %arg0, %c0_i32 : i32, i32
  }
}

module attributes {stable_mosaic.version = 11 : i64} {
  func.func @_proto_interaction_kernel(%arg0: i32, %arg1: memref<8x128xf32, #tpu.memory_space<vmem>>, %arg2: memref<128x8xf32, #tpu.memory_space<vmem>>, %arg3: memref<8x128xf32, #tpu.memory_space<vmem>>, %arg4: memref<1x128xf32, #tpu.memory_space<vmem>>, %arg5: memref<1x128xf32, #tpu.memory_space<vmem>>, %arg6: memref<128x128xf32, #tpu.memory_space<vmem>>, %arg7: memref<1x128xf32, #tpu.memory_space<vmem>>, %arg8: memref<8x128xf32, #tpu.memory_space<vmem>>) attributes {dimension_semantics = [#tpu.dimension_semantics<parallel>], iteration_bounds = array<i64: 2>, scalar_prefetch = 0 : i64, scratch_operands = 0 : i64, tpu.core_type = #tpu.core_type<tc>, window_params = [{transform_indices = @transform_0, window_bounds = array<i64: 8, 128>}, {pipeline_mode = #tpu.pipeline_mode<synchronous>, transform_indices = @transform_1, window_bounds = array<i64: 128, 8>}, {pipeline_mode = #tpu.pipeline_mode<synchronous>, transform_indices = @transform_2, window_bounds = array<i64: 8, 128>}, {pipeline_mode = #tpu.pipeline_mode<synchronous>, transform_indices = @transform_3, window_bounds = array<i64: 1, 128>}, {pipeline_mode = #tpu.pipeline_mode<synchronous>, transform_indices = @transform_4, window_bounds = array<i64: 1, 128>}, {pipeline_mode = #tpu.pipeline_mode<synchronous>, transform_indices = @transform_5, window_bounds = array<i64: 128, 128>}, {pipeline_mode = #tpu.pipeline_mode<synchronous>, transform_indices = @transform_6, window_bounds = array<i64: 1, 128>}, {transform_indices = @transform_7, window_bounds = array<i64: 8, 128>}]} {
    %c0 = arith.constant 0 : index
    %c0_0 = arith.constant 0 : index
    %0 = vector.load %arg1[%c0, %c0_0] : memref<8x128xf32, #tpu.memory_space<vmem>>, vector<8x128xf32>
    %c0_1 = arith.constant 0 : index
    %c0_2 = arith.constant 0 : index
    %1 = vector.load %arg2[%c0_1, %c0_2] : memref<128x8xf32, #tpu.memory_space<vmem>>, vector<128x8xf32>
    %cst = arith.constant dense<0.000000e+00> : vector<8x8xf32>
    %2 = tpu.matmul %0, %1, %cst {dimension_numbers = #tpu.dot_dimension_numbers<[1], [0], [0], [1], [0, 0, 1, 1], [], []>} : vector<8x128xf32>, vector<128x8xf32>, vector<8x8xf32> -> vector<8x8xf32>
    %3 = tpu.iota {dimensions = array<i32: 1>} : vector<8x8xi32>
    %c5_i32 = arith.constant 5 : i32
    %4 = vector.broadcast %c5_i32 : i32 to vector<8x8xi32>
    %5 = arith.cmpi slt, %3, %4 : vector<8x8xi32>
    %cst_3 = arith.constant -1.000000e+30 : f32
    %6 = vector.broadcast %cst_3 : f32 to vector<8x8xf32>
    %7 = arith.select %5, %2, %6 : vector<8x8xi1>, vector<8x8xf32>
    %cst_4 = arith.constant dense<0xFF800000> : vector<8xf32>
    %8 = vector.multi_reduction <maximumf>, %7, %cst_4 [1] : vector<8x8xf32> to vector<8xf32>
    %9 = vector.shape_cast %8 : vector<8xf32> to vector<8x1xf32>
    %10 = vector.broadcast %9 : vector<8x1xf32> to vector<8x8xf32>
    %11 = arith.subf %7, %10 : vector<8x8xf32>
    %12 = math.exp %11 : vector<8x8xf32>
    %cst_5 = arith.constant dense<0.000000e+00> : vector<8xf32>
    %13 = vector.multi_reduction <add>, %12, %cst_5 [1] : vector<8x8xf32> to vector<8xf32>
    %14 = vector.shape_cast %13 : vector<8xf32> to vector<8x1xf32>
    %15 = vector.broadcast %14 : vector<8x1xf32> to vector<8x8xf32>
    %16 = arith.divf %12, %15 : vector<8x8xf32>
    %c0_6 = arith.constant 0 : index
    %c0_7 = arith.constant 0 : index
    %17 = vector.load %arg3[%c0_6, %c0_7] : memref<8x128xf32, #tpu.memory_space<vmem>>, vector<8x128xf32>
    %cst_8 = arith.constant dense<0.000000e+00> : vector<8x128xf32>
    %18 = tpu.matmul %16, %17, %cst_8 {dimension_numbers = #tpu.dot_dimension_numbers<[1], [0], [0], [1], [0, 0, 1, 1], [], []>} : vector<8x8xf32>, vector<8x128xf32>, vector<8x128xf32> -> vector<8x128xf32>
    %cst_9 = arith.constant 2.000000e+00 : f32
    %19 = vector.broadcast %cst_9 : f32 to vector<8x128xf32>
    %20 = arith.mulf %19, %0 : vector<8x128xf32>
    %21 = arith.addf %20, %18 : vector<8x128xf32>
    %cst_10 = arith.constant dense<0.000000e+00> : vector<8xf32>
    %22 = vector.multi_reduction <add>, %21, %cst_10 [1] : vector<8x128xf32> to vector<8xf32>
    %23 = vector.shape_cast %22 : vector<8xf32> to vector<8x1xf32>
    %cst_11 = arith.constant 1.280000e+02 : f32
    %24 = vector.broadcast %cst_11 : f32 to vector<8x1xf32>
    %25 = arith.divf %23, %24 : vector<8x1xf32>
    %26 = vector.broadcast %25 : vector<8x1xf32> to vector<8x128xf32>
    %27 = arith.subf %21, %26 : vector<8x128xf32>
    %28 = arith.mulf %27, %27 : vector<8x128xf32>
    %cst_12 = arith.constant dense<0.000000e+00> : vector<8xf32>
    %29 = vector.multi_reduction <add>, %28, %cst_12 [1] : vector<8x128xf32> to vector<8xf32>
    %30 = vector.shape_cast %29 : vector<8xf32> to vector<8x1xf32>
    %cst_13 = arith.constant 1.280000e+02 : f32
    %31 = vector.broadcast %cst_13 : f32 to vector<8x1xf32>
    %32 = arith.divf %30, %31 : vector<8x1xf32>
    %cst_14 = arith.constant 4.000000e-07 : f32
    %33 = vector.broadcast %cst_14 : f32 to vector<8x1xf32>
    %34 = arith.addf %32, %33 : vector<8x1xf32>
    %35 = math.rsqrt %34 : vector<8x1xf32>
    %36 = vector.broadcast %35 : vector<8x1xf32> to vector<8x128xf32>
    %37 = arith.mulf %27, %36 : vector<8x128xf32>
    %c0_15 = arith.constant 0 : index
    %c0_16 = arith.constant 0 : index
    %38 = vector.load %arg4[%c0_15, %c0_16] : memref<1x128xf32, #tpu.memory_space<vmem>>, vector<1x128xf32>
    %39 = vector.broadcast %38 : vector<1x128xf32> to vector<8x128xf32>
    %40 = arith.mulf %37, %39 : vector<8x128xf32>
    %c0_17 = arith.constant 0 : index
    %c0_18 = arith.constant 0 : index
    %41 = vector.load %arg5[%c0_17, %c0_18] : memref<1x128xf32, #tpu.memory_space<vmem>>, vector<1x128xf32>
    %42 = vector.broadcast %41 : vector<1x128xf32> to vector<8x128xf32>
    %43 = arith.addf %40, %42 : vector<8x128xf32>
    %c0_19 = arith.constant 0 : index
    %c0_20 = arith.constant 0 : index
    %44 = vector.load %arg6[%c0_19, %c0_20] : memref<128x128xf32, #tpu.memory_space<vmem>>, vector<128x128xf32>
    %cst_21 = arith.constant dense<0.000000e+00> : vector<8x128xf32>
    %45 = tpu.matmul %43, %44, %cst_21 {dimension_numbers = #tpu.dot_dimension_numbers<[1], [0], [0], [1], [0, 0, 1, 1], [], []>} : vector<8x128xf32>, vector<128x128xf32>, vector<8x128xf32> -> vector<8x128xf32>
    %c0_22 = arith.constant 0 : index
    %c0_23 = arith.constant 0 : index
    %46 = vector.load %arg7[%c0_22, %c0_23] : memref<1x128xf32, #tpu.memory_space<vmem>>, vector<1x128xf32>
    %47 = vector.broadcast %46 : vector<1x128xf32> to vector<8x128xf32>
    %48 = arith.addf %45, %47 : vector<8x128xf32>
    %cst_24 = arith.constant 5.000000e-01 : f32
    %49 = vector.broadcast %cst_24 : f32 to vector<8x128xf32>
    %50 = arith.mulf %49, %48 : vector<8x128xf32>
    %cst_25 = arith.constant 0.707106769 : f32
    %51 = vector.broadcast %cst_25 : f32 to vector<8x128xf32>
    %52 = arith.mulf %48, %51 : vector<8x128xf32>
    %53 = math.erf %52 : vector<8x128xf32>
    %cst_26 = arith.constant 1.000000e+00 : f32
    %54 = vector.broadcast %cst_26 : f32 to vector<8x128xf32>
    %55 = arith.addf %54, %53 : vector<8x128xf32>
    %56 = arith.mulf %50, %55 : vector<8x128xf32>
    %c0_27 = arith.constant 0 : index
    %c0_28 = arith.constant 0 : index
    %57 = vector.load %arg8[%c0_27, %c0_28] : memref<8x128xf32, #tpu.memory_space<vmem>>, vector<8x128xf32>
    tpu.vector_store %arg8[%c0_27, %c0_28], %56 {strides = array<i32>} : memref<8x128xf32, #tpu.memory_space<vmem>>, vector<8x128xf32>,
    return
  }
  func.func @transform_0(%arg0: i32) -> (i32, i32) {
    %c0_i32 = arith.constant 0 : i32
    %c0_i32_0 = arith.constant 0 : i32
    return %arg0, %c0_i32 : i32, i32
  }
  func.func @transform_1(%arg0: i32) -> (i32, i32) {
    %c0_i32 = arith.constant 0 : i32
    %c0_i32_0 = arith.constant 0 : i32
    %c0_i32_1 = arith.constant 0 : i32
    return %c0_i32, %c0_i32_0 : i32, i32
  }
  func.func @transform_2(%arg0: i32) -> (i32, i32) {
    %c0_i32 = arith.constant 0 : i32
    %c0_i32_0 = arith.constant 0 : i32
    %c0_i32_1 = arith.constant 0 : i32
    return %c0_i32, %c0_i32_0 : i32, i32
  }
  func.func @transform_3(%arg0: i32) -> (i32, i32) {
    %c0_i32 = arith.constant 0 : i32
    %c0_i32_0 = arith.constant 0 : i32
    %c0_i32_1 = arith.constant 0 : i32
    return %c0_i32, %c0_i32_0 : i32, i32
  }
  func.func @transform_4(%arg0: i32) -> (i32, i32) {
    %c0_i32 = arith.constant 0 : i32
    %c0_i32_0 = arith.constant 0 : i32
    %c0_i32_1 = arith.constant 0 : i32
    return %c0_i32, %c0_i32_0 : i32, i32
  }
  func.func @transform_5(%arg0: i32) -> (i32, i32) {
    %c0_i32 = arith.constant 0 : i32
    %c0_i32_0 = arith.constant 0 : i32
    %c0_i32_1 = arith.constant 0 : i32
    return %c0_i32, %c0_i32_0 : i32, i32
  }
  func.func @transform_6(%arg0: i32) -> (i32, i32) {
    %c0_i32 = arith.constant 0 : i32
    %c0_i32_0 = arith.constant 0 : i32
    %c0_i32_1 = arith.constant 0 : i32
    return %c0_i32, %c0_i32_0 : i32, i32
  }
  func.func @transform_7(%arg0: i32) -> (i32, i32) {
    %c0_i32 = arith.constant 0 : i32
    %c0_i32_0 = arith.constant 0 : i32
    return %arg0, %c0_i32 : i32, i32
  }
}

</mosaic_0001>

<llo_original>
// kernel: tpu_custom_call.1
$region0: #{tpu_custom_call.1}
  #allocation0 [shape = 'u32[]', space=smem, size = 0x4, offset = 0x4, fixed_abs, tag = 'smem constant byte address 0x4 - core index']
  #allocation1 [shape = 'u32[144,128]{1,0:T(1,128)}', space=vmem, size = 0x12000, scoped, tag = 'internal scratch']
  %s0 = inlined_call_operand.vmem [shape: f32[16,128], index: 0, kind: input, shape index: {}]
  %s1 = inlined_call_operand.vmem [shape: f32[128,8], index: 1, kind: input, shape index: {}]
  %s2 = inlined_call_operand.vmem [shape: f32[8,128], index: 2, kind: input, shape index: {}]
  %s3 = inlined_call_operand.vmem [shape: f32[1,128], index: 3, kind: input, shape index: {}]
  %s4 = inlined_call_operand.vmem [shape: f32[1,128], index: 4, kind: input, shape index: {}]
  %s5 = inlined_call_operand.vmem [shape: f32[128,128], index: 5, kind: input, shape index: {}]
  %s6 = inlined_call_operand.vmem [shape: f32[1,128], index: 6, kind: input, shape index: {}]
  %s7 = inlined_call_operand.hbm [shape: f32[16,128], index: 7, kind: output, shape index: {}]
  %s8 = sld [smem:[#allocation0]]
  $region61: #{tpu_custom_call.1} parent=0
    _
  %s10 = ssub.s32 1, %s8
  %s11 = scalar_select 0, %s10, %s8
  $region1: #{tpu_custom_call.1} parent=0
    #allocation2 [shape = 'u8[8192]{0}', space=vmem, size = 0x2000, scoped, tag = 'output window, operand 0']
    #allocation3 [shape = 's32[2]{0}', space=sflag, size = 0x8, scoped, tag = 'scoped memory for tpu_custom_call.1']
    %12 = vsyncpa [#allocation3], 0
    %s13 = scalar_lea.sflag [#allocation3], 1
    %14 = vsyncpa %s13, 0
    loop: start=0, step=1, limit=4
    $region2: #{tpu_custom_call.1} parent=1 // loop_pre_header
      _
    $region3: #{tpu_custom_call.1} parent=1 // loop_header
      %s16 = sphi 0, %s20
      %p17 = scmp.ge.s32.totalorder %s16, 4
      %s26 = sphi 0, %s28
      %s29 = sphi 0, %s26
      %s30 = sphi 0, %s29
      %s46 = sphi 0, %s30
      %s50 = sphi 0, %s50
      %s52 = sphi 0, %s50
      %s53 = sphi 0, %s52
      %s67 = sphi 0, %s53
      %s71 = sphi 0, %s71
      %s73 = sphi 0, %s71
      %s74 = sphi 0, %s73
      %s88 = sphi 0, %s74
      %s92 = sphi 0, %s92
      %s94 = sphi 0, %s92
      %s95 = sphi 0, %s94
      %s109 = sphi 0, %s95
      %s113 = sphi 0, %s113
      %s115 = sphi 0, %s113
      %s116 = sphi 0, %s115
      %s130 = sphi 0, %s116
      %s134 = sphi 0, %s134
      %s136 = sphi 0, %s134
      %s137 = sphi 0, %s136
      %s151 = sphi 0, %s137
      %s155 = sphi 0, %s155
      %s157 = sphi 0, %s155
      %s158 = sphi 0, %s157
      %s172 = sphi 0, %s158
      %s178 = sphi 0, %s180
      %s181 = sphi 0, %s178
      %s182 = sphi 0, %s181
      %s198 = sphi 0, %s182
    $region4: #{tpu_custom_call.1} parent=1 // loop_header_branch
      %19 = sbr.rel (%p17) target = $region8
    $region5: #{tpu_custom_call.1} parent=1 // loop_body
      %s21 = ssub.s32 %s16, 1
      %s22 = ssub.s32 %s16, 2
      %s23 = sadd.s32 %s16, 1
      %s24 = ssub.s32 %s16, %s23
      %p25 = scmp.eq.s32.totalorder %s24, 0
      %s27 = sadd.s32 %s26, 1
      %s28 = scalar_select %p25, %s26, %s27
      %p31 = pneg %p25
      %p32 = scmp.eq.s32.totalorder %s16, 1
      %p33 = por %p31, %p32
      %p34 = scmp.ne.s32.totalorder %s26, %s29
      %p35 = scmp.eq.s32.totalorder %s16, 0
      %p36 = por %p34, %p35
      %p37 = scmp.ne.s32.totalorder %s26, %s29
      %p38 = scmp.eq.s32.totalorder %s21, 1
      %p39 = por %p37, %p38
      %p40 = scmp.ne.s32.totalorder %s29, %s30
      %p41 = scmp.eq.s32.totalorder %s21, 0
      %p42 = por %p40, %p41
      %p43 = scmp.ne.s32.totalorder %s29, %s30
      %p44 = scmp.eq.s32.totalorder %s22, 1
      %p45 = por %p43, %p44
      %p47 = scmp.ne.s32.totalorder %s30, %s46
      %p48 = scmp.eq.s32.totalorder %s22, 0
      %p49 = por %p47, %p48
      %s51 = sadd.s32 %s50, 1
      %p54 = scmp.eq.s32.totalorder %s16, 1
      %p55 = scmp.ne.s32.totalorder %s50, %s52
      %p56 = scmp.eq.s32.totalorder %s16, 0
      %p57 = por %p55, %p56
      %p58 = scmp.ne.s32.totalorder %s50, %s52
      %p59 = scmp.eq.s32.totalorder %s21, 1
      %p60 = por %p58, %p59
      %p61 = scmp.ne.s32.totalorder %s52, %s53
      %p62 = scmp.eq.s32.totalorder %s21, 0
      %p63 = por %p61, %p62
      %p64 = scmp.ne.s32.totalorder %s52, %s53
      %p65 = scmp.eq.s32.totalorder %s22, 1
      %p66 = por %p64, %p65
      %p68 = scmp.ne.s32.totalorder %s53, %s67
      %p69 = scmp.eq.s32.totalorder %s22, 0
      %p70 = por %p68, %p69
      %s72 = sadd.s32 %s71, 1
      %p75 = scmp.eq.s32.totalorder %s16, 1
      %p76 = scmp.ne.s32.totalorder %s71, %s73
      %p77 = scmp.eq.s32.totalorder %s16, 0
      %p78 = por %p76, %p77
      %p79 = scmp.ne.s32.totalorder %s71, %s73
      %p80 = scmp.eq.s32.totalorder %s21, 1
      %p81 = por %p79, %p80
      %p82 = scmp.ne.s32.totalorder %s73, %s74
      %p83 = scmp.eq.s32.totalorder %s21, 0
      %p84 = por %p82, %p83
      %p85 = scmp.ne.s32.totalorder %s73, %s74
      %p86 = scmp.eq.s32.totalorder %s22, 1
      %p87 = por %p85, %p86
      %p89 = scmp.ne.s32.totalorder %s74, %s88
      %p90 = scmp.eq.s32.totalorder %s22, 0
      %p91 = por %p89, %p90
      %s93 = sadd.s32 %s92, 1
      %p96 = scmp.eq.s32.totalorder %s16, 1
      %p97 = scmp.ne.s32.totalorder %s92, %s94
      %p98 = scmp.eq.s32.totalorder %s16, 0
      %p99 = por %p97, %p98
      %p100 = scmp.ne.s32.totalorder %s92, %s94
      %p101 = scmp.eq.s32.totalorder %s21, 1
      %p102 = por %p100, %p101
      %p103 = scmp.ne.s32.totalorder %s94, %s95
      %p104 = scmp.eq.s32.totalorder %s21, 0
      %p105 = por %p103, %p104
      %p106 = scmp.ne.s32.totalorder %s94, %s95
      %p107 = scmp.eq.s32.totalorder %s22, 1
      %p108 = por %p106, %p107
      %p110 = scmp.ne.s32.totalorder %s95, %s109
      %p111 = scmp.eq.s32.totalorder %s22, 0
      %p112 = por %p110, %p111
      %s114 = sadd.s32 %s113, 1
      %p117 = scmp.eq.s32.totalorder %s16, 1
      %p118 = scmp.ne.s32.totalorder %s113, %s115
      %p119 = scmp.eq.s32.totalorder %s16, 0
      %p120 = por %p118, %p119
      %p121 = scmp.ne.s32.totalorder %s113, %s115
      %p122 = scmp.eq.s32.totalorder %s21, 1
      %p123 = por %p121, %p122
      %p124 = scmp.ne.s32.totalorder %s115, %s116
      %p125 = scmp.eq.s32.totalorder %s21, 0
      %p126 = por %p124, %p125
      %p127 = scmp.ne.s32.totalorder %s115, %s116
      %p128 = scmp.eq.s32.totalorder %s22, 1
      %p129 = por %p127, %p128
      %p131 = scmp.ne.s32.totalorder %s116, %s130
      %p132 = scmp.eq.s32.totalorder %s22, 0
      %p133 = por %p131, %p132
      %s135 = sadd.s32 %s134, 1
      %p138 = scmp.eq.s32.totalorder %s16, 1
      %p139 = scmp.ne.s32.totalorder %s134, %s136
      %p140 = scmp.eq.s32.totalorder %s16, 0
      %p141 = por %p139, %p140
      %p142 = scmp.ne.s32.totalorder %s134, %s136
      %p143 = scmp.eq.s32.totalorder %s21, 1
      %p144 = por %p142, %p143
      %p145 = scmp.ne.s32.totalorder %s136, %s137
      %p146 = scmp.eq.s32.totalorder %s21, 0
      %p147 = por %p145, %p146
      %p148 = scmp.ne.s32.totalorder %s136, %s137
      %p149 = scmp.eq.s32.totalorder %s22, 1
      %p150 = por %p148, %p149
      %p152 = scmp.ne.s32.totalorder %s137, %s151
      %p153 = scmp.eq.s32.totalorder %s22, 0
      %p154 = por %p152, %p153
      %s156 = sadd.s32 %s155, 1
      %p159 = scmp.eq.s32.totalorder %s16, 1
      %p160 = scmp.ne.s32.totalorder %s155, %s157
      %p161 = scmp.eq.s32.totalorder %s16, 0
      %p162 = por %p160, %p161
      %p163 = scmp.ne.s32.totalorder %s155, %s157
      %p164 = scmp.eq.s32.totalorder %s21, 1
      %p165 = por %p163, %p164
      %p166 = scmp.ne.s32.totalorder %s157, %s158
      %p167 = scmp.eq.s32.totalorder %s21, 0
      %p168 = por %p166, %p167
      %p169 = scmp.ne.s32.totalorder %s157, %s158
      %p170 = scmp.eq.s32.totalorder %s22, 1
      %p171 = por %p169, %p170
      %p173 = scmp.ne.s32.totalorder %s158, %s172
      %p174 = scmp.eq.s32.totalorder %s22, 0
      %p175 = por %p173, %p174
      %s176 = ssub.s32 %s16, %s23
      %p177 = scmp.eq.s32.totalorder %s176, 0
      %s179 = sadd.s32 %s178, 1
      %s180 = scalar_select %p177, %s178, %s179
      %p183 = pneg %p177
      %p184 = scmp.eq.s32.totalorder %s16, 1
      %p185 = por %p183, %p184
      %p186 = scmp.ne.s32.totalorder %s178, %s181
      %p187 = scmp.eq.s32.totalorder %s16, 0
      %p188 = por %p186, %p187
      %p189 = scmp.ne.s32.totalorder %s178, %s181
      %p190 = scmp.eq.s32.totalorder %s21, 1
      %p191 = por %p189, %p190
      %p192 = scmp.ne.s32.totalorder %s181, %s182
      %p193 = scmp.eq.s32.totalorder %s21, 0
      %p194 = por %p192, %p193
      %p195 = scmp.ne.s32.totalorder %s181, %s182
      %p196 = scmp.eq.s32.totalorder %s22, 1
      %p197 = por %p195, %p196
      %p199 = scmp.ne.s32.totalorder %s182, %s198
      %p200 = scmp.eq.s32.totalorder %s22, 0
      %p201 = por %p199, %p200
      %p202 = scmp.le.s32.totalorder 1, %s16
      %p203 = scmp.lt.s32.totalorder %s16, 3
      %p204 = pnand %p202, %p203
      %p205 = pneg %p204
      // Predicated region
      $region9: #{tpu_custom_call.1} parent=5 // pred_check
        _
      $region10: #{tpu_custom_call.1} parent=5 // pred_check_branch
        %207 = sbr.rel (%p204) target = $region12
      $region11: #{tpu_custom_call.1} parent=5 // pred_region
        %s208 = ssub.s32 %s16, 1
        // Predicated region
        $region13: #{tpu_custom_call.1} parent=11 // pred_check
          %p209 = pneg %p63
        $region14: #{tpu_custom_call.1} parent=11 // pred_check_branch
          %211 = sbr.rel (%p209) target = $region16
        $region15: #{tpu_custom_call.1} parent=11 // pred_region
          _
        $region16: #{tpu_custom_call.1} parent=11 // pred_fallthru
          _
        // Predicated region
        $region17: #{tpu_custom_call.1} parent=11 // pred_check
          %p212 = pneg %p84
        $region18: #{tpu_custom_call.1} parent=11 // pred_check_branch
          %214 = sbr.rel (%p212) target = $region20
        $region19: #{tpu_custom_call.1} parent=11 // pred_region
          _
        $region20: #{tpu_custom_call.1} parent=11 // pred_fallthru
          _
        // Predicated region
        $region21: #{tpu_custom_call.1} parent=11 // pred_check
          %p215 = pneg %p105
        $region22: #{tpu_custom_call.1} parent=11 // pred_check_branch
          %217 = sbr.rel (%p215) target = $region24
        $region23: #{tpu_custom_call.1} parent=11 // pred_region
          _
        $region24: #{tpu_custom_call.1} parent=11 // pred_fallthru
          _
        // Predicated region
        $region25: #{tpu_custom_call.1} parent=11 // pred_check
          %p218 = pneg %p126
        $region26: #{tpu_custom_call.1} parent=11 // pred_check_branch
          %220 = sbr.rel (%p218) target = $region28
        $region27: #{tpu_custom_call.1} parent=11 // pred_region
          _
        $region28: #{tpu_custom_call.1} parent=11 // pred_fallthru
          _
        // Predicated region
        $region29: #{tpu_custom_call.1} parent=11 // pred_check
          %p221 = pneg %p147
        $region30: #{tpu_custom_call.1} parent=11 // pred_check_branch
          %223 = sbr.rel (%p221) target = $region32
        $region31: #{tpu_custom_call.1} parent=11 // pred_region
          _
        $region32: #{tpu_custom_call.1} parent=11 // pred_fallthru
          _
        // Predicated region
        $region33: #{tpu_custom_call.1} parent=11 // pred_check
          %p224 = pneg %p168
        $region34: #{tpu_custom_call.1} parent=11 // pred_check_branch
          %226 = sbr.rel (%p224) target = $region36
        $region35: #{tpu_custom_call.1} parent=11 // pred_region
          _
        $region36: #{tpu_custom_call.1} parent=11 // pred_fallthru
          _
      $region12: #{tpu_custom_call.1} parent=5 // pred_fallthru
        _
      %p227 = scmp.lt.s32.totalorder %s16, 2
      // Predicated region
      $region37: #{tpu_custom_call.1} parent=5 // pred_check
        %p228 = pneg %p227
      $region38: #{tpu_custom_call.1} parent=5 // pred_check_branch
        %230 = sbr.rel (%p228) target = $region40
      $region39: #{tpu_custom_call.1} parent=5 // pred_region
        // Predicated region
        $region41: #{tpu_custom_call.1} parent=39 // pred_check
          %p231 = pneg %p36
        $region42: #{tpu_custom_call.1} parent=39 // pred_check_branch
          %233 = sbr.rel (%p231) target = $region44
        $region43: #{tpu_custom_call.1} parent=39 // pred_region
          %p234 = scmp.lt.s32.totalorder %s16, 1
          %s235 = scalar_select %p234, %s16, 1
          %s236 = smul.addr %s235, 8
          %s237 = scalar_lea.vmem %s0, %s236
        $region44: #{tpu_custom_call.1} parent=39 // pred_fallthru
          _
      $region40: #{tpu_custom_call.1} parent=5 // pred_fallthru
        _
      %p238 = scmp.le.s32.totalorder 1, %s16
      %p239 = scmp.lt.s32.totalorder %s16, 3
      %p240 = pnand %p238, %p239
      %p241 = pneg %p240
      // Predicated region
      $region45: #{tpu_custom_call.1} parent=5 // pred_check
        _
      $region46: #{tpu_custom_call.1} parent=5 // pred_check_branch
        %243 = sbr.rel (%p240) target = $region48
      $region47: #{tpu_custom_call.1} parent=5 // pred_region
        %s244 = ssub.s32 %s16, 1
        %p245 = scmp.lt.s32.totalorder %s21, 1
        %s246 = scalar_select %p245, %s21, 1
        %s247 = smul.addr %s246, 8
        %s248 = scalar_lea.vmem %s0, %s247
        %p249 = pneg %p42
        %p250 = pneg %p39
        %p251 = pneg %p63
        %p252 = pneg %p60
        %p253 = pneg %p84
        %p254 = pneg %p81
        %p255 = pneg %p105
        %p256 = pneg %p102
        %p257 = pneg %p126
        %p258 = pneg %p123
        %p259 = pneg %p147
        %p260 = pneg %p144
        %p261 = pneg %p168
        %p262 = pneg %p165
        %p263 = pneg %p194
        %p264 = pneg %p191
        %s265 = sand.u32 %s181, 1
        %s266 = scalar_lea.sflag [#allocation3], %s265
        %s267 = sand.u32 %s181, 1
        %s268 = smul.addr %s267, 8
        %s269 = scalar_lea.vmem [#allocation2], %s268
        %p270 = scmp.lt.s32.totalorder %s21, 1
        %s271 = scalar_select %p270, %s21, 1
        %s272 = smul.addr %s271, 8
        %s273 = scalar_lea.vmem %s0, %s272
        %v274 = vld [vmem:[%s273] sm:$0xff]
        %v275 = vld [vmem:[%s1] sm:$0xff]
        %v276 = vld [vmem:[%s1 + $0x8] sm:$0xff]
        %v277 = vld [vmem:[%s1 + $0x10] sm:$0xff]
        %v278 = vld [vmem:[%s1 + $0x18] sm:$0xff]
        %v279 = vld [vmem:[%s1 + $0x20] sm:$0xff]
        %v280 = vld [vmem:[%s1 + $0x28] sm:$0xff]
        %v281 = vld [vmem:[%s1 + $0x30] sm:$0xff]
        %v282 = vld [vmem:[%s1 + $0x38] sm:$0xff]
        %v283 = vld [vmem:[%s1 + $0x40] sm:$0xff]
        %v284 = vld [vmem:[%s1 + $0x48] sm:$0xff]
        %v285 = vld [vmem:[%s1 + $0x50] sm:$0xff]
        %v286 = vld [vmem:[%s1 + $0x58] sm:$0xff]
        %v287 = vld [vmem:[%s1 + $0x60] sm:$0xff]
        %v288 = vld [vmem:[%s1 + $0x68] sm:$0xff]
        %v289 = vld [vmem:[%s1 + $0x70] sm:$0xff]
        %v290 = vld [vmem:[%s1 + $0x78] sm:$0xff]
        %291 = vmatprep.subr.mxu0 0.0
        %292 = vmatpush1.msra.mxu0 %v275
        %293 = vmatprep.subr.mxu0 0.0
        %294 = vmatpush1.msra.mxu0 %v276
        %295 = vmatprep.subr.mxu0 0.0
        %296 = vmatpush1.msra.mxu0 %v277
        %297 = vmatprep.subr.mxu0 0.0
        %298 = vmatpush1.msra.mxu0 %v278
        %299 = vmatprep.subr.mxu0 0.0
        %300 = vmatpush1.msra.mxu0 %v279
        %301 = vmatprep.subr.mxu0 0.0
        %302 = vmatpush1.msra.mxu0 %v280
        %303 = vmatprep.subr.mxu0 0.0
        %304 = vmatpush1.msra.mxu0 %v281
        %305 = vmatprep.subr.mxu0 0.0
        %306 = vmatpush1.msra.mxu0 %v282
        %307 = vmatprep.subr.mxu0 0.0
        %308 = vmatpush1.msra.mxu0 %v283
        %309 = vmatprep.subr.mxu0 0.0
        %310 = vmatpush1.msra.mxu0 %v284
        %311 = vmatprep.subr.mxu0 0.0
        %312 = vmatpush1.msra.mxu0 %v285
        %313 = vmatprep.subr.mxu0 0.0
        %314 = vmatpush1.msra.mxu0 %v286
        %315 = vmatprep.subr.mxu0 0.0
        %316 = vmatpush1.msra.mxu0 %v287
        %317 = vmatprep.subr.mxu0 0.0
        %318 = vmatpush1.msra.mxu0 %v288
        %319 = vmatprep.subr.mxu0 0.0
        %320 = vmatpush1.msra.mxu0 %v289
        %321 = vmatprep.subr.mxu0 0.0
        %322 = vmatpush1.msra.mxu0 %v290
        %323 = vmatprep.subr.mxu0 0.0
        %324 = vmatpush1.msra.mxu0 0.0
        %325 = vmatprep.subr.mxu0 0.0
        %326 = vmatpush1.msra.mxu0 0.0
        %327 = vmatprep.subr.mxu0 0.0
        %328 = vmatpush1.msra.mxu0 0.0
        %329 = vmatprep.subr.mxu0 0.0
        %330 = vmatpush1.msra.mxu0 0.0
        %331 = vmatprep.subr.mxu0 0.0
        %332 = vmatpush1.msra.mxu0 0.0
        %333 = vmatprep.subr.mxu0 0.0
        %334 = vmatpush1.msra.mxu0 0.0
        %335 = vmatprep.subr.mxu0 0.0
        %336 = vmatpush1.msra.mxu0 0.0
        %337 = vmatprep.subr.mxu0 0.0
        %338 = vmatpush1.msra.mxu0 0.0
        %339 = vmatprep.subr.mxu0 0.0
        %340 = vmatpush1.msra.mxu0 0.0
        %341 = vmatprep.subr.mxu0 0.0
        %342 = vmatpush1.msra.mxu0 0.0
        %343 = vmatprep.subr.mxu0 0.0
        %344 = vmatpush1.msra.mxu0 0.0
        %345 = vmatprep.subr.mxu0 0.0
        %346 = vmatpush1.msra.mxu0 0.0
        %347 = vmatprep.subr.mxu0 0.0
        %348 = vmatpush1.msra.mxu0 0.0
        %349 = vmatprep.subr.mxu0 0.0
        %350 = vmatpush1.msra.mxu0 0.0
        %351 = vmatprep.subr.mxu0 0.0
        %352 = vmatpush1.msra.mxu0 0.0
        %353 = vmatprep.subr.mxu0 0.0
        %354 = vmatpush1.msra.mxu0 0.0
        %355 = vmatprep.mubr.f32.mxu0 0.0
        %356 = vmatmul.mubr.f32.gmra.mrb[0].mxu0 %v274
        %v357 = vpop.f32.mrb[0].mxu0
        %v358 = vadd.f32 0.0, %v357
        %v359 = vpop.f32.mrb[0].mxu0
        %360 = vdwg.mxu0
        %v361 = vlaneseq
        %v362 = vand.u32 %v361, 127
        %vm363 = vcmp.lt.s32.totalorder %v362, 5
        %v364 = vsel %vm363, %v358, -1e+30
        %vm365 = vcmask 64512
        %v366 = vsel %vm365, %v364, -inf
        %367 = vmax.xlane.f32.xlu0 %v366
        %v368 = vpop.xlane.xlu0 %367
        %v369 = vsub.f32 %v364, %v368
        %v370 = vmul.f32 %v369, 1.442695
        %v371 = vpow.pop %v370
        %v372 = vsel %vm365, %v371, 0.0
        %373 = vadd.xlane.f32.xlu0 %v372
        %v374 = vpop.xlane.xlu0 %373
        %v375 = vrcp.pop %v374
        %v376 = vmul.f32 %v371, %v375
        %v377 = vld [vmem:[%s2] sm:$0xff]
        %v379 = vsel %vm365, %v376, 0
        %381 = vmatprep.subr.mxu0 0.0
        %382 = vmatpush1.msra.mxu0 %v377
        %383 = vmatprep.subr.mxu0 0.0
        %384 = vmatpush1.msra.mxu0 0.0
        %385 = vmatprep.subr.mxu0 0.0
        %386 = vmatpush1.msra.mxu0 0.0
        %387 = vmatprep.subr.mxu0 0.0
        %388 = vmatpush1.msra.mxu0 0.0
        %389 = vmatprep.subr.mxu0 0.0
        %390 = vmatpush1.msra.mxu0 0.0
        %391 = vmatprep.subr.mxu0 0.0
        %392 = vmatpush1.msra.mxu0 0.0
        %393 = vmatprep.subr.mxu0 0.0
        %394 = vmatpush1.msra.mxu0 0.0
        %395 = vmatprep.subr.mxu0 0.0
        %396 = vmatpush1.msra.mxu0 0.0
        %397 = vmatprep.subr.mxu0 0.0
        %398 = vmatpush1.msra.mxu0 0.0
        %399 = vmatprep.subr.mxu0 0.0
        %400 = vmatpush1.msra.mxu0 0.0
        %401 = vmatprep.subr.mxu0 0.0
        %402 = vmatpush1.msra.mxu0 0.0
        %403 = vmatprep.subr.mxu0 0.0
        %404 = vmatpush1.msra.mxu0 0.0
        %405 = vmatprep.subr.mxu0 0.0
        %406 = vmatpush1.msra.mxu0 0.0
        %407 = vmatprep.subr.mxu0 0.0
        %408 = vmatpush1.msra.mxu0 0.0
        %409 = vmatprep.subr.mxu0 0.0
        %410 = vmatpush1.msra.mxu0 0.0
        %411 = vmatprep.subr.mxu0 0.0
        %412 = vmatpush1.msra.mxu0 0.0
        %413 = vmatprep.subr.mxu0 0.0
        %414 = vmatpush1.msra.mxu0 0.0
        %415 = vmatprep.subr.mxu0 0.0
        %416 = vmatpush1.msra.mxu0 0.0
        %417 = vmatprep.subr.mxu0 0.0
        %418 = vmatpush1.msra.mxu0 0.0
        %419 = vmatprep.subr.mxu0 0.0
        %420 = vmatpush1.msra.mxu0 0.0
        %421 = vmatprep.subr.mxu0 0.0
        %422 = vmatpush1.msra.mxu0 0.0
        %423 = vmatprep.subr.mxu0 0.0
        %424 = vmatpush1.msra.mxu0 0.0
        %425 = vmatprep.subr.mxu0 0.0
        %426 = vmatpush1.msra.mxu0 0.0
        %427 = vmatprep.subr.mxu0 0.0
        %428 = vmatpush1.msra.mxu0 0.0
        %429 = vmatprep.subr.mxu0 0.0
        %430 = vmatpush1.msra.mxu0 0.0
        %431 = vmatprep.subr.mxu0 0.0
        %432 = vmatpush1.msra.mxu0 0.0
        %433 = vmatprep.subr.mxu0 0.0
        %434 = vmatpush1.msra.mxu0 0.0
        %435 = vmatprep.subr.mxu0 0.0
        %436 = vmatpush1.msra.mxu0 0.0
        %437 = vmatprep.subr.mxu0 0.0
        %438 = vmatpush1.msra.mxu0 0.0
        %439 = vmatprep.subr.mxu0 0.0
        %440 = vmatpush1.msra.mxu0 0.0
        %441 = vmatprep.subr.mxu0 0.0
        %442 = vmatpush1.msra.mxu0 0.0
        %443 = vmatprep.subr.mxu0 0.0
        %444 = vmatpush1.msra.mxu0 0.0
        %445 = vmatprep.mubr.f32.mxu0 0.0
        %446 = vmatmul.mubr.f32.gmra.mrb[0].mxu0 %v379
        %v447 = vpop.f32.mrb[0].mxu0
        %v448 = vadd.f32 0.0, %v447
        %v449 = vpop.f32.mrb[0].mxu0
        %450 = vdwg.mxu0
        %v451 = vmul.f32 %v274, 2.0
        %v452 = vadd.f32 %v451, %v448
        %453 = vadd.xlane.f32.xlu0 %v452
        %v454 = vpop.xlane.xlu0 %453
        %v455 = vrcp.pop 128.0
        %v456 = vmul.f32 %v454, %v455
        %v457 = vsub.f32 %v452, %v456
        %v458 = vmul.f32 %v457, %v457
        %459 = vadd.xlane.f32.xlu0 %v458
        %v460 = vpop.xlane.xlu0 %459
        %v461 = vmul.f32 %v460, %v455
        %v462 = vadd.f32 %v461, 4e-07
        %v463 = vrsqrt.pop %v462
        %v464 = vmul.f32 %v457, %v463
        %v465 = vld [vmem:[%s3] sm:$0x1]
        %v467 = vlaneseq
        %v468 = vshrl.u32 %v467, 7
        %v469 = vsub.s32 0, %v468
        %v470 = vrot.slane %v465, %v469
        %v472 = vmul.f32 %v464, %v470
        %v473 = vld [vmem:[%s4] sm:$0x1]
        %v475 = vlaneseq
        %v476 = vshrl.u32 %v475, 7
        %v477 = vsub.s32 0, %v476
        %v478 = vrot.slane %v473, %v477
        %v480 = vadd.f32 %v472, %v478
        %v481 = vld [vmem:[%s5] sm:$0xff]
        %v482 = vld [vmem:[%s5 + $0x8] sm:$0xff]
        %v483 = vld [vmem:[%s5 + $0x10] sm:$0xff]
        %v484 = vld [vmem:[%s5 + $0x18] sm:$0xff]
        %v485 = vld [vmem:[%s5 + $0x20] sm:$0xff]
        %v486 = vld [vmem:[%s5 + $0x28] sm:$0xff]
        %v487 = vld [vmem:[%s5 + $0x30] sm:$0xff]
        %v488 = vld [vmem:[%s5 + $0x38] sm:$0xff]
        %v489 = vld [vmem:[%s5 + $0x40] sm:$0xff]
        %v490 = vld [vmem:[%s5 + $0x48] sm:$0xff]
        %v491 = vld [vmem:[%s5 + $0x50] sm:$0xff]
        %v492 = vld [vmem:[%s5 + $0x58] sm:$0xff]
        %v493 = vld [vmem:[%s5 + $0x60] sm:$0xff]
        %v494 = vld [vmem:[%s5 + $0x68] sm:$0xff]
        %v495 = vld [vmem:[%s5 + $0x70] sm:$0xff]
        %v496 = vld [vmem:[%s5 + $0x78] sm:$0xff]
        %v497 = vld [vmem:[%s6] sm:$0x1]
        %v499 = vlaneseq
        %v500 = vshrl.u32 %v499, 7
        %v501 = vsub.s32 0, %v500
        %v502 = vrot.slane %v497, %v501
        %504 = vmatprep.subr.mxu0 0.0
        %505 = vmatpush1.msra.mxu0 %v481
        %506 = vmatprep.subr.mxu0 0.0
        %507 = vmatpush1.msra.mxu0 %v482
        %508 = vmatprep.subr.mxu0 0.0
        %509 = vmatpush1.msra.mxu0 %v483
        %510 = vmatprep.subr.mxu0 0.0
        %511 = vmatpush1.msra.mxu0 %v484
        %512 = vmatprep.subr.mxu0 0.0
        %513 = vmatpush1.msra.mxu0 %v485
        %514 = vmatprep.subr.mxu0 0.0
        %515 = vmatpush1.msra.mxu0 %v486
        %516 = vmatprep.subr.mxu0 0.0
        %517 = vmatpush1.msra.mxu0 %v487
        %518 = vmatprep.subr.mxu0 0.0
        %519 = vmatpush1.msra.mxu0 %v488
        %520 = vmatprep.subr.mxu0 0.0
        %521 = vmatpush1.msra.mxu0 %v489
        %522 = vmatprep.subr.mxu0 0.0
        %523 = vmatpush1.msra.mxu0 %v490
        %524 = vmatprep.subr.mxu0 0.0
        %525 = vmatpush1.msra.mxu0 %v491
        %526 = vmatprep.subr.mxu0 0.0
        %527 = vmatpush1.msra.mxu0 %v492
        %528 = vmatprep.subr.mxu0 0.0
        %529 = vmatpush1.msra.mxu0 %v493
        %530 = vmatprep.subr.mxu0 0.0
        %531 = vmatpush1.msra.mxu0 %v494
        %532 = vmatprep.subr.mxu0 0.0
        %533 = vmatpush1.msra.mxu0 %v495
        %534 = vmatprep.subr.mxu0 0.0
        %535 = vmatpush1.msra.mxu0 %v496
        %536 = vmatprep.subr.mxu0 0.0
        %537 = vmatpush1.msra.mxu0 0.0
        %538 = vmatprep.subr.mxu0 0.0
        %539 = vmatpush1.msra.mxu0 0.0
        %540 = vmatprep.subr.mxu0 0.0
        %541 = vmatpush1.msra.mxu0 0.0
        %542 = vmatprep.subr.mxu0 0.0
        %543 = vmatpush1.msra.mxu0 0.0
        %544 = vmatprep.subr.mxu0 0.0
        %545 = vmatpush1.msra.mxu0 0.0
        %546 = vmatprep.subr.mxu0 0.0
        %547 = vmatpush1.msra.mxu0 0.0
        %548 = vmatprep.subr.mxu0 0.0
        %549 = vmatpush1.msra.mxu0 0.0
        %550 = vmatprep.subr.mxu0 0.0
        %551 = vmatpush1.msra.mxu0 0.0
        %552 = vmatprep.subr.mxu0 0.0
        %553 = vmatpush1.msra.mxu0 0.0
        %554 = vmatprep.subr.mxu0 0.0
        %555 = vmatpush1.msra.mxu0 0.0
        %556 = vmatprep.subr.mxu0 0.0
        %557 = vmatpush1.msra.mxu0 0.0
        %558 = vmatprep.subr.mxu0 0.0
        %559 = vmatpush1.msra.mxu0 0.0
        %560 = vmatprep.subr.mxu0 0.0
        %561 = vmatpush1.msra.mxu0 0.0
        %562 = vmatprep.subr.mxu0 0.0
        %563 = vmatpush1.msra.mxu0 0.0
        %564 = vmatprep.subr.mxu0 0.0
        %565 = vmatpush1.msra.mxu0 0.0
        %566 = vmatprep.subr.mxu0 0.0
        %567 = vmatpush1.msra.mxu0 0.0
        %568 = vmatprep.mubr.f32.mxu0 0.0
        %569 = vmatmul.mubr.f32.gmra.mrb[0].mxu0 %v480
        %v570 = vpop.f32.mrb[0].mxu0
        %v571 = vadd.f32 %v502, %v570
        %v572 = vpop.f32.mrb[0].mxu0
        %573 = vdwg.mxu0
        %v574 = vmul.f32 %v571, 0.5
        %v575 = vmul.f32 %v571, 0.70710677
        %v576 = verf.f32.pop %v575
        %v577 = vadd.f32 %v576, 1.0
        %v578 = vmul.f32 %v574, %v577
        %579 = vst [vmem:[%s269] sm:$0xff] %v578
        %s580 = sand.u32 %s181, 1
        %s581 = scalar_lea.sflag [#allocation3], %s580
        %s582 = sand.u32 %s181, 1
        %s583 = smul.addr %s582, 8
        %s584 = scalar_lea.vmem [#allocation2], %s583
        // Predicated region
        $region49: #{tpu_custom_call.1} parent=47 // pred_check
          %p585 = pneg %p191
        $region50: #{tpu_custom_call.1} parent=47 // pred_check_branch
          %587 = sbr.rel (%p585) target = $region52
        $region51: #{tpu_custom_call.1} parent=47 // pred_region
          %s589 = ssub.s32 128, 128
          %590 = vsyncadd %s581, %s589
          %s591 = smul.addr %s21, 128
          %s592 = scalar_lea.hbm %s7, %s591
          %s594 = sshll.u32 %s584, 4
          %s595 = int_to_ptr.vmem [resolvable:$true] %s594
          %597 = dma.vmem_to_hbm [thread:$0]  %s595, 128, %s592, %s581
        $region52: #{tpu_custom_call.1} parent=47 // pred_fallthru
          _
      $region48: #{tpu_custom_call.1} parent=5 // pred_fallthru
        _
      %p598 = scmp.le.s32.totalorder 2, %s16
      // Predicated region
      $region53: #{tpu_custom_call.1} parent=5 // pred_check
        %p599 = pneg %p598
      $region54: #{tpu_custom_call.1} parent=5 // pred_check_branch
        %601 = sbr.rel (%p599) target = $region56
      $region55: #{tpu_custom_call.1} parent=5 // pred_region
        %s602 = ssub.s32 %s16, 2
        // Predicated region
        $region57: #{tpu_custom_call.1} parent=55 // pred_check
          %p603 = pneg %p197
        $region58: #{tpu_custom_call.1} parent=55 // pred_check_branch
          %605 = sbr.rel (%p603) target = $region60
        $region59: #{tpu_custom_call.1} parent=55 // pred_region
          %s606 = sand.u32 %s182, 1
          %s607 = scalar_lea.sflag [#allocation3], %s606
          %s608 = sand.u32 %s182, 1
          %s609 = smul.addr %s608, 8
          %s610 = scalar_lea.vmem [#allocation2], %s609
          %611 = dma.done %s607, 128
        $region60: #{tpu_custom_call.1} parent=55 // pred_fallthru
          _
      $region56: #{tpu_custom_call.1} parent=5 // pred_fallthru
        _
    $region6: #{tpu_custom_call.1} parent=1 // loop_footer
      %s20 = sadd.s32 1, %s16
    $region7: #{tpu_custom_call.1} parent=1 // loop_footer_branch
      %15 = sbr.rel target = $region3
    $region8: #{tpu_custom_call.1} parent=1 // loop_exit
      _
    %612 = vsyncpa [#allocation3], 1
    %s613 = scalar_lea.sflag [#allocation3], 1
    %614 = vsyncpa %s613, 1

// kernel: tpu_custom_call.1
$region0: #{tpu_custom_call.1}
  #allocation0 [shape = 'u32[]', space=smem, size = 0x4, offset = 0x4, fixed_abs, tag = 'smem constant byte address 0x4 - core index']
  #allocation1 [shape = 'u32[144,128]{1,0:T(1,128)}', space=vmem, size = 0x12000, scoped, tag = 'internal scratch']
  %s0 = inlined_call_operand.vmem [shape: f32[16,128], index: 0, kind: input, shape index: {}]
  %s1 = inlined_call_operand.vmem [shape: f32[128,8], index: 1, kind: input, shape index: {}]
  %s2 = inlined_call_operand.vmem [shape: f32[8,128], index: 2, kind: input, shape index: {}]
  %s3 = inlined_call_operand.vmem [shape: f32[1,128], index: 3, kind: input, shape index: {}]
  %s4 = inlined_call_operand.vmem [shape: f32[1,128], index: 4, kind: input, shape index: {}]
  %s5 = inlined_call_operand.vmem [shape: f32[128,128], index: 5, kind: input, shape index: {}]
  %s6 = inlined_call_operand.vmem [shape: f32[1,128], index: 6, kind: input, shape index: {}]
  %s7 = inlined_call_operand.hbm [shape: f32[16,128], index: 7, kind: output, shape index: {}]
  %s8 = sld [smem:[#allocation0]]
  $region61: #{tpu_custom_call.1} parent=0
    _
  %s10 = ssub.s32 1, %s8
  %s11 = scalar_select 0, %s10, %s8
  $region1: #{tpu_custom_call.1} parent=0
    #allocation2 [shape = 'u8[8192]{0}', space=vmem, size = 0x2000, scoped, tag = 'output window, operand 0']
    #allocation3 [shape = 's32[2]{0}', space=sflag, size = 0x8, scoped, tag = 'scoped memory for tpu_custom_call.1']
    %12 = vsyncpa [#allocation3], 0
    %s13 = scalar_lea.sflag [#allocation3], 1
    %14 = vsyncpa %s13, 0
    loop: start=0, step=1, limit=4
    $region2: #{tpu_custom_call.1} parent=1 // loop_pre_header
      _
    $region3: #{tpu_custom_call.1} parent=1 // loop_header
      %s16 = sphi 0, %s20
      %p17 = scmp.ge.s32.totalorder %s16, 4
      %s26 = sphi 0, %s28
      %s29 = sphi 0, %s26
      %s30 = sphi 0, %s29
      %s46 = sphi 0, %s30
      %s50 = sphi 0, %s50
      %s52 = sphi 0, %s50
      %s53 = sphi 0, %s52
      %s67 = sphi 0, %s53
      %s71 = sphi 0, %s71
      %s73 = sphi 0, %s71
      %s74 = sphi 0, %s73
      %s88 = sphi 0, %s74
      %s92 = sphi 0, %s92
      %s94 = sphi 0, %s92
      %s95 = sphi 0, %s94
      %s109 = sphi 0, %s95
      %s113 = sphi 0, %s113
      %s115 = sphi 0, %s113
      %s116 = sphi 0, %s115
      %s130 = sphi 0, %s116
      %s134 = sphi 0, %s134
      %s136 = sphi 0, %s134
      %s137 = sphi 0, %s136
      %s151 = sphi 0, %s137
      %s155 = sphi 0, %s155
      %s157 = sphi 0, %s155
      %s158 = sphi 0, %s157
      %s172 = sphi 0, %s158
      %s178 = sphi 0, %s180
      %s181 = sphi 0, %s178
      %s182 = sphi 0, %s181
      %s198 = sphi 0, %s182
    $region4: #{tpu_custom_call.1} parent=1 // loop_header_branch
      %19 = sbr.rel (%p17) target = $region8
    $region5: #{tpu_custom_call.1} parent=1 // loop_body
      %s21 = ssub.s32 %s16, 1
      %s22 = ssub.s32 %s16, 2
      %s23 = sadd.s32 %s16, 1
      %s24 = ssub.s32 %s16, %s23
      %p25 = scmp.eq.s32.totalorder %s24, 0
      %s27 = sadd.s32 %s26, 1
      %s28 = scalar_select %p25, %s26, %s27
      %p31 = pneg %p25
      %p32 = scmp.eq.s32.totalorder %s16, 1
      %p33 = por %p31, %p32
      %p34 = scmp.ne.s32.totalorder %s26, %s29
      %p35 = scmp.eq.s32.totalorder %s16, 0
      %p36 = por %p34, %p35
      %p37 = scmp.ne.s32.totalorder %s26, %s29
      %p38 = scmp.eq.s32.totalorder %s21, 1
      %p39 = por %p37, %p38
      %p40 = scmp.ne.s32.totalorder %s29, %s30
      %p41 = scmp.eq.s32.totalorder %s21, 0
      %p42 = por %p40, %p41
      %p43 = scmp.ne.s32.totalorder %s29, %s30
      %p44 = scmp.eq.s32.totalorder %s22, 1
      %p45 = por %p43, %p44
      %p47 = scmp.ne.s32.totalorder %s30, %s46
      %p48 = scmp.eq.s32.totalorder %s22, 0
      %p49 = por %p47, %p48
      %s51 = sadd.s32 %s50, 1
      %p54 = scmp.eq.s32.totalorder %s16, 1
      %p55 = scmp.ne.s32.totalorder %s50, %s52
      %p56 = scmp.eq.s32.totalorder %s16, 0
      %p57 = por %p55, %p56
      %p58 = scmp.ne.s32.totalorder %s50, %s52
      %p59 = scmp.eq.s32.totalorder %s21, 1
      %p60 = por %p58, %p59
      %p61 = scmp.ne.s32.totalorder %s52, %s53
      %p62 = scmp.eq.s32.totalorder %s21, 0
      %p63 = por %p61, %p62
      %p64 = scmp.ne.s32.totalorder %s52, %s53
      %p65 = scmp.eq.s32.totalorder %s22, 1
      %p66 = por %p64, %p65
      %p68 = scmp.ne.s32.totalorder %s53, %s67
      %p69 = scmp.eq.s32.totalorder %s22, 0
      %p70 = por %p68, %p69
      %s72 = sadd.s32 %s71, 1
      %p75 = scmp.eq.s32.totalorder %s16, 1
      %p76 = scmp.ne.s32.totalorder %s71, %s73
      %p77 = scmp.eq.s32.totalorder %s16, 0
      %p78 = por %p76, %p77
      %p79 = scmp.ne.s32.totalorder %s71, %s73
      %p80 = scmp.eq.s32.totalorder %s21, 1
      %p81 = por %p79, %p80
      %p82 = scmp.ne.s32.totalorder %s73, %s74
      %p83 = scmp.eq.s32.totalorder %s21, 0
      %p84 = por %p82, %p83
      %p85 = scmp.ne.s32.totalorder %s73, %s74
      %p86 = scmp.eq.s32.totalorder %s22, 1
      %p87 = por %p85, %p86
      %p89 = scmp.ne.s32.totalorder %s74, %s88
      %p90 = scmp.eq.s32.totalorder %s22, 0
      %p91 = por %p89, %p90
      %s93 = sadd.s32 %s92, 1
      %p96 = scmp.eq.s32.totalorder %s16, 1
      %p97 = scmp.ne.s32.totalorder %s92, %s94
      %p98 = scmp.eq.s32.totalorder %s16, 0
      %p99 = por %p97, %p98
      %p100 = scmp.ne.s32.totalorder %s92, %s94
      %p101 = scmp.eq.s32.totalorder %s21, 1
      %p102 = por %p100, %p101
      %p103 = scmp.ne.s32.totalorder %s94, %s95
      %p104 = scmp.eq.s32.totalorder %s21, 0
      %p105 = por %p103, %p104
      %p106 = scmp.ne.s32.totalorder %s94, %s95
      %p107 = scmp.eq.s32.totalorder %s22, 1
      %p108 = por %p106, %p107
      %p110 = scmp.ne.s32.totalorder %s95, %s109
      %p111 = scmp.eq.s32.totalorder %s22, 0
      %p112 = por %p110, %p111
      %s114 = sadd.s32 %s113, 1
      %p117 = scmp.eq.s32.totalorder %s16, 1
      %p118 = scmp.ne.s32.totalorder %s113, %s115
      %p119 = scmp.eq.s32.totalorder %s16, 0
      %p120 = por %p118, %p119
      %p121 = scmp.ne.s32.totalorder %s113, %s115
      %p122 = scmp.eq.s32.totalorder %s21, 1
      %p123 = por %p121, %p122
      %p124 = scmp.ne.s32.totalorder %s115, %s116
      %p125 = scmp.eq.s32.totalorder %s21, 0
      %p126 = por %p124, %p125
      %p127 = scmp.ne.s32.totalorder %s115, %s116
      %p128 = scmp.eq.s32.totalorder %s22, 1
      %p129 = por %p127, %p128
      %p131 = scmp.ne.s32.totalorder %s116, %s130
      %p132 = scmp.eq.s32.totalorder %s22, 0
      %p133 = por %p131, %p132
      %s135 = sadd.s32 %s134, 1
      %p138 = scmp.eq.s32.totalorder %s16, 1
      %p139 = scmp.ne.s32.totalorder %s134, %s136
      %p140 = scmp.eq.s32.totalorder %s16, 0
      %p141 = por %p139, %p140
      %p142 = scmp.ne.s32.totalorder %s134, %s136
      %p143 = scmp.eq.s32.totalorder %s21, 1
      %p144 = por %p142, %p143
      %p145 = scmp.ne.s32.totalorder %s136, %s137
      %p146 = scmp.eq.s32.totalorder %s21, 0
      %p147 = por %p145, %p146
      %p148 = scmp.ne.s32.totalorder %s136, %s137
      %p149 = scmp.eq.s32.totalorder %s22, 1
      %p150 = por %p148, %p149
      %p152 = scmp.ne.s32.totalorder %s137, %s151
      %p153 = scmp.eq.s32.totalorder %s22, 0
      %p154 = por %p152, %p153
      %s156 = sadd.s32 %s155, 1
      %p159 = scmp.eq.s32.totalorder %s16, 1
      %p160 = scmp.ne.s32.totalorder %s155, %s157
      %p161 = scmp.eq.s32.totalorder %s16, 0
      %p162 = por %p160, %p161
      %p163 = scmp.ne.s32.totalorder %s155, %s157
      %p164 = scmp.eq.s32.totalorder %s21, 1
      %p165 = por %p163, %p164
      %p166 = scmp.ne.s32.totalorder %s157, %s158
      %p167 = scmp.eq.s32.totalorder %s21, 0
      %p168 = por %p166, %p167
      %p169 = scmp.ne.s32.totalorder %s157, %s158
      %p170 = scmp.eq.s32.totalorder %s22, 1
      %p171 = por %p169, %p170
      %p173 = scmp.ne.s32.totalorder %s158, %s172
      %p174 = scmp.eq.s32.totalorder %s22, 0
      %p175 = por %p173, %p174
      %s176 = ssub.s32 %s16, %s23
      %p177 = scmp.eq.s32.totalorder %s176, 0
      %s179 = sadd.s32 %s178, 1
      %s180 = scalar_select %p177, %s178, %s179
      %p183 = pneg %p177
      %p184 = scmp.eq.s32.totalorder %s16, 1
      %p185 = por %p183, %p184
      %p186 = scmp.ne.s32.totalorder %s178, %s181
      %p187 = scmp.eq.s32.totalorder %s16, 0
      %p188 = por %p186, %p187
      %p189 = scmp.ne.s32.totalorder %s178, %s181
      %p190 = scmp.eq.s32.totalorder %s21, 1
      %p191 = por %p189, %p190
      %p192 = scmp.ne.s32.totalorder %s181, %s182
      %p193 = scmp.eq.s32.totalorder %s21, 0
      %p194 = por %p192, %p193
      %p195 = scmp.ne.s32.totalorder %s181, %s182
      %p196 = scmp.eq.s32.totalorder %s22, 1
      %p197 = por %p195, %p196
      %p199 = scmp.ne.s32.totalorder %s182, %s198
      %p200 = scmp.eq.s32.totalorder %s22, 0
      %p201 = por %p199, %p200
      %p202 = scmp.le.s32.totalorder 1, %s16
      %p203 = scmp.lt.s32.totalorder %s16, 3
      %p204 = pnand %p202, %p203
      %p205 = pneg %p204
      // Predicated region
      $region9: #{tpu_custom_call.1} parent=5 // pred_check
        _
      $region10: #{tpu_custom_call.1} parent=5 // pred_check_branch
        %207 = sbr.rel (%p204) target = $region12
      $region11: #{tpu_custom_call.1} parent=5 // pred_region
        %s208 = ssub.s32 %s16, 1
        // Predicated region
        $region13: #{tpu_custom_call.1} parent=11 // pred_check
          %p209 = pneg %p63
        $region14: #{tpu_custom_call.1} parent=11 // pred_check_branch
          %211 = sbr.rel (%p209) target = $region16
        $region15: #{tpu_custom_call.1} parent=11 // pred_region
          _
        $region16: #{tpu_custom_call.1} parent=11 // pred_fallthru
          _
        // Predicated region
        $region17: #{tpu_custom_call.1} parent=11 // pred_check
          %p212 = pneg %p84
        $region18: #{tpu_custom_call.1} parent=11 // pred_check_branch
          %214 = sbr.rel (%p212) target = $region20
        $region19: #{tpu_custom_call.1} parent=11 // pred_region
          _
        $region20: #{tpu_custom_call.1} parent=11 // pred_fallthru
          _
        // Predicated region
        $region21: #{tpu_custom_call.1} parent=11 // pred_check
          %p215 = pneg %p105
        $region22: #{tpu_custom_call.1} parent=11 // pred_check_branch
          %217 = sbr.rel (%p215) target = $region24
        $region23: #{tpu_custom_call.1} parent=11 // pred_region
          _
        $region24: #{tpu_custom_call.1} parent=11 // pred_fallthru
          _
        // Predicated region
        $region25: #{tpu_custom_call.1} parent=11 // pred_check
          %p218 = pneg %p126
        $region26: #{tpu_custom_call.1} parent=11 // pred_check_branch
          %220 = sbr.rel (%p218) target = $region28
        $region27: #{tpu_custom_call.1} parent=11 // pred_region
          _
        $region28: #{tpu_custom_call.1} parent=11 // pred_fallthru
          _
        // Predicated region
        $region29: #{tpu_custom_call.1} parent=11 // pred_check
          %p221 = pneg %p147
        $region30: #{tpu_custom_call.1} parent=11 // pred_check_branch
          %223 = sbr.rel (%p221) target = $region32
        $region31: #{tpu_custom_call.1} parent=11 // pred_region
          _
        $region32: #{tpu_custom_call.1} parent=11 // pred_fallthru
          _
        // Predicated region
        $region33: #{tpu_custom_call.1} parent=11 // pred_check
          %p224 = pneg %p168
        $region34: #{tpu_custom_call.1} parent=11 // pred_check_branch
          %226 = sbr.rel (%p224) target = $region36
        $region35: #{tpu_custom_call.1} parent=11 // pred_region
          _
        $region36: #{tpu_custom_call.1} parent=11 // pred_fallthru
          _
      $region12: #{tpu_custom_call.1} parent=5 // pred_fallthru
        _
      %p227 = scmp.lt.s32.totalorder %s16, 2
      // Predicated region
      $region37: #{tpu_custom_call.1} parent=5 // pred_check
        %p228 = pneg %p227
      $region38: #{tpu_custom_call.1} parent=5 // pred_check_branch
        %230 = sbr.rel (%p228) target = $region40
      $region39: #{tpu_custom_call.1} parent=5 // pred_region
        // Predicated region
        $region41: #{tpu_custom_call.1} parent=39 // pred_check
          %p231 = pneg %p36
        $region42: #{tpu_custom_call.1} parent=39 // pred_check_branch
          %233 = sbr.rel (%p231) target = $region44
        $region43: #{tpu_custom_call.1} parent=39 // pred_region
          %p234 = scmp.lt.s32.totalorder %s16, 1
          %s235 = scalar_select %p234, %s16, 1
          %s236 = smul.addr %s235, 8
          %s237 = scalar_lea.vmem %s0, %s236
        $region44: #{tpu_custom_call.1} parent=39 // pred_fallthru
          _
      $region40: #{tpu_custom_call.1} parent=5 // pred_fallthru
        _
      %p238 = scmp.le.s32.totalorder 1, %s16
      %p239 = scmp.lt.s32.totalorder %s16, 3
      %p240 = pnand %p238, %p239
      %p241 = pneg %p240
      // Predicated region
      $region45: #{tpu_custom_call.1} parent=5 // pred_check
        _
      $region46: #{tpu_custom_call.1} parent=5 // pred_check_branch
        %243 = sbr.rel (%p240) target = $region48
      $region47: #{tpu_custom_call.1} parent=5 // pred_region
        %s244 = ssub.s32 %s16, 1
        %p245 = scmp.lt.s32.totalorder %s21, 1
        %s246 = scalar_select %p245, %s21, 1
        %s247 = smul.addr %s246, 8
        %s248 = scalar_lea.vmem %s0, %s247
        %p249 = pneg %p42
        %p250 = pneg %p39
        %p251 = pneg %p63
        %p252 = pneg %p60
        %p253 = pneg %p84
        %p254 = pneg %p81
        %p255 = pneg %p105
        %p256 = pneg %p102
        %p257 = pneg %p126
        %p258 = pneg %p123
        %p259 = pneg %p147
        %p260 = pneg %p144
        %p261 = pneg %p168
        %p262 = pneg %p165
        %p263 = pneg %p194
        %p264 = pneg %p191
        %s265 = sand.u32 %s181, 1
        %s266 = scalar_lea.sflag [#allocation3], %s265
        %s267 = sand.u32 %s181, 1
        %s268 = smul.addr %s267, 8
        %s269 = scalar_lea.vmem [#allocation2], %s268
        %p270 = scmp.lt.s32.totalorder %s21, 1
        %s271 = scalar_select %p270, %s21, 1
        %s272 = smul.addr %s271, 8
        %s273 = scalar_lea.vmem %s0, %s272
        %v274 = vld [vmem:[%s273] sm:$0xff]
        %v275 = vld [vmem:[%s1] sm:$0xff]
        %v276 = vld [vmem:[%s1 + $0x8] sm:$0xff]
        %v277 = vld [vmem:[%s1 + $0x10] sm:$0xff]
        %v278 = vld [vmem:[%s1 + $0x18] sm:$0xff]
        %v279 = vld [vmem:[%s1 + $0x20] sm:$0xff]
        %v280 = vld [vmem:[%s1 + $0x28] sm:$0xff]
        %v281 = vld [vmem:[%s1 + $0x30] sm:$0xff]
        %v282 = vld [vmem:[%s1 + $0x38] sm:$0xff]
        %v283 = vld [vmem:[%s1 + $0x40] sm:$0xff]
        %v284 = vld [vmem:[%s1 + $0x48] sm:$0xff]
        %v285 = vld [vmem:[%s1 + $0x50] sm:$0xff]
        %v286 = vld [vmem:[%s1 + $0x58] sm:$0xff]
        %v287 = vld [vmem:[%s1 + $0x60] sm:$0xff]
        %v288 = vld [vmem:[%s1 + $0x68] sm:$0xff]
        %v289 = vld [vmem:[%s1 + $0x70] sm:$0xff]
        %v290 = vld [vmem:[%s1 + $0x78] sm:$0xff]
        %291 = vmatprep.subr.mxu0 0.0
        %292 = vmatpush1.msra.mxu0 %v275
        %293 = vmatprep.subr.mxu0 0.0
        %294 = vmatpush1.msra.mxu0 %v276
        %295 = vmatprep.subr.mxu0 0.0
        %296 = vmatpush1.msra.mxu0 %v277
        %297 = vmatprep.subr.mxu0 0.0
        %298 = vmatpush1.msra.mxu0 %v278
        %299 = vmatprep.subr.mxu0 0.0
        %300 = vmatpush1.msra.mxu0 %v279
        %301 = vmatprep.subr.mxu0 0.0
        %302 = vmatpush1.msra.mxu0 %v280
        %303 = vmatprep.subr.mxu0 0.0
        %304 = vmatpush1.msra.mxu0 %v281
        %305 = vmatprep.subr.mxu0 0.0
        %306 = vmatpush1.msra.mxu0 %v282
        %307 = vmatprep.subr.mxu0 0.0
        %308 = vmatpush1.msra.mxu0 %v283
        %309 = vmatprep.subr.mxu0 0.0
        %310 = vmatpush1.msra.mxu0 %v284
        %311 = vmatprep.subr.mxu0 0.0
        %312 = vmatpush1.msra.mxu0 %v285
        %313 = vmatprep.subr.mxu0 0.0
        %314 = vmatpush1.msra.mxu0 %v286
        %315 = vmatprep.subr.mxu0 0.0
        %316 = vmatpush1.msra.mxu0 %v287
        %317 = vmatprep.subr.mxu0 0.0
        %318 = vmatpush1.msra.mxu0 %v288
        %319 = vmatprep.subr.mxu0 0.0
        %320 = vmatpush1.msra.mxu0 %v289
        %321 = vmatprep.subr.mxu0 0.0
        %322 = vmatpush1.msra.mxu0 %v290
        %323 = vmatprep.subr.mxu0 0.0
        %324 = vmatpush1.msra.mxu0 0.0
        %325 = vmatprep.subr.mxu0 0.0
        %326 = vmatpush1.msra.mxu0 0.0
        %327 = vmatprep.subr.mxu0 0.0
        %328 = vmatpush1.msra.mxu0 0.0
        %329 = vmatprep.subr.mxu0 0.0
        %330 = vmatpush1.msra.mxu0 0.0
        %331 = vmatprep.subr.mxu0 0.0
        %332 = vmatpush1.msra.mxu0 0.0
        %333 = vmatprep.subr.mxu0 0.0
        %334 = vmatpush1.msra.mxu0 0.0
        %335 = vmatprep.subr.mxu0 0.0
        %336 = vmatpush1.msra.mxu0 0.0
        %337 = vmatprep.subr.mxu0 0.0
        %338 = vmatpush1.msra.mxu0 0.0
        %339 = vmatprep.subr.mxu0 0.0
        %340 = vmatpush1.msra.mxu0 0.0
        %341 = vmatprep.subr.mxu0 0.0
        %342 = vmatpush1.msra.mxu0 0.0
        %343 = vmatprep.subr.mxu0 0.0
        %344 = vmatpush1.msra.mxu0 0.0
        %345 = vmatprep.subr.mxu0 0.0
        %346 = vmatpush1.msra.mxu0 0.0
        %347 = vmatprep.subr.mxu0 0.0
        %348 = vmatpush1.msra.mxu0 0.0
        %349 = vmatprep.subr.mxu0 0.0
        %350 = vmatpush1.msra.mxu0 0.0
        %351 = vmatprep.subr.mxu0 0.0
        %352 = vmatpush1.msra.mxu0 0.0
        %353 = vmatprep.subr.mxu0 0.0
        %354 = vmatpush1.msra.mxu0 0.0
        %355 = vmatprep.mubr.f32.mxu0 0.0
        %356 = vmatmul.mubr.f32.gmra.mrb[0].mxu0 %v274
        %v357 = vpop.f32.mrb[0].mxu0
        %v358 = vadd.f32 0.0, %v357
        %v359 = vpop.f32.mrb[0].mxu0
        %360 = vdwg.mxu0
        %v361 = vlaneseq
        %v362 = vand.u32 %v361, 127
        %vm363 = vcmp.lt.s32.totalorder %v362, 5
        %v364 = vsel %vm363, %v358, -1e+30
        %vm365 = vcmask 64512
        %v366 = vsel %vm365, %v364, -inf
        %367 = vmax.xlane.f32.xlu0 %v366
        %v368 = vpop.xlane.xlu0 %367
        %v369 = vsub.f32 %v364, %v368
        %v370 = vmul.f32 %v369, 1.442695
        %v371 = vpow.pop %v370
        %v372 = vsel %vm365, %v371, 0.0
        %373 = vadd.xlane.f32.xlu0 %v372
        %v374 = vpop.xlane.xlu0 %373
        %v375 = vrcp.pop %v374
        %v376 = vmul.f32 %v371, %v375
        %v377 = vld [vmem:[%s2] sm:$0xff]
        %v379 = vsel %vm365, %v376, 0
        %381 = vmatprep.subr.mxu0 0.0
        %382 = vmatpush1.msra.mxu0 %v377
        %383 = vmatprep.subr.mxu0 0.0
        %384 = vmatpush1.msra.mxu0 0.0
        %385 = vmatprep.subr.mxu0 0.0
        %386 = vmatpush1.msra.mxu0 0.0
        %387 = vmatprep.subr.mxu0 0.0
        %388 = vmatpush1.msra.mxu0 0.0
        %389 = vmatprep.subr.mxu0 0.0
        %390 = vmatpush1.msra.mxu0 0.0
        %391 = vmatprep.subr.mxu0 0.0
        %392 = vmatpush1.msra.mxu0 0.0
        %393 = vmatprep.subr.mxu0 0.0
        %394 = vmatpush1.msra.mxu0 0.0
        %395 = vmatprep.subr.mxu0 0.0
        %396 = vmatpush1.msra.mxu0 0.0
        %397 = vmatprep.subr.mxu0 0.0
        %398 = vmatpush1.msra.mxu0 0.0
        %399 = vmatprep.subr.mxu0 0.0
        %400 = vmatpush1.msra.mxu0 0.0
        %401 = vmatprep.subr.mxu0 0.0
        %402 = vmatpush1.msra.mxu0 0.0
        %403 = vmatprep.subr.mxu0 0.0
        %404 = vmatpush1.msra.mxu0 0.0
        %405 = vmatprep.subr.mxu0 0.0
        %406 = vmatpush1.msra.mxu0 0.0
        %407 = vmatprep.subr.mxu0 0.0
        %408 = vmatpush1.msra.mxu0 0.0
        %409 = vmatprep.subr.mxu0 0.0
        %410 = vmatpush1.msra.mxu0 0.0
        %411 = vmatprep.subr.mxu0 0.0
        %412 = vmatpush1.msra.mxu0 0.0
        %413 = vmatprep.subr.mxu0 0.0
        %414 = vmatpush1.msra.mxu0 0.0
        %415 = vmatprep.subr.mxu0 0.0
        %416 = vmatpush1.msra.mxu0 0.0
        %417 = vmatprep.subr.mxu0 0.0
        %418 = vmatpush1.msra.mxu0 0.0
        %419 = vmatprep.subr.mxu0 0.0
        %420 = vmatpush1.msra.mxu0 0.0
        %421 = vmatprep.subr.mxu0 0.0
        %422 = vmatpush1.msra.mxu0 0.0
        %423 = vmatprep.subr.mxu0 0.0
        %424 = vmatpush1.msra.mxu0 0.0
        %425 = vmatprep.subr.mxu0 0.0
        %426 = vmatpush1.msra.mxu0 0.0
        %427 = vmatprep.subr.mxu0 0.0
        %428 = vmatpush1.msra.mxu0 0.0
        %429 = vmatprep.subr.mxu0 0.0
        %430 = vmatpush1.msra.mxu0 0.0
        %431 = vmatprep.subr.mxu0 0.0
        %432 = vmatpush1.msra.mxu0 0.0
        %433 = vmatprep.subr.mxu0 0.0
        %434 = vmatpush1.msra.mxu0 0.0
        %435 = vmatprep.subr.mxu0 0.0
        %436 = vmatpush1.msra.mxu0 0.0
        %437 = vmatprep.subr.mxu0 0.0
        %438 = vmatpush1.msra.mxu0 0.0
        %439 = vmatprep.subr.mxu0 0.0
        %440 = vmatpush1.msra.mxu0 0.0
        %441 = vmatprep.subr.mxu0 0.0
        %442 = vmatpush1.msra.mxu0 0.0
        %443 = vmatprep.subr.mxu0 0.0
        %444 = vmatpush1.msra.mxu0 0.0
        %445 = vmatprep.mubr.f32.mxu0 0.0
        %446 = vmatmul.mubr.f32.gmra.mrb[0].mxu0 %v379
        %v447 = vpop.f32.mrb[0].mxu0
        %v448 = vadd.f32 0.0, %v447
        %v449 = vpop.f32.mrb[0].mxu0
        %450 = vdwg.mxu0
        %v451 = vmul.f32 %v274, 2.0
        %v452 = vadd.f32 %v451, %v448
        %453 = vadd.xlane.f32.xlu0 %v452
        %v454 = vpop.xlane.xlu0 %453
        %v455 = vrcp.pop 128.0
        %v456 = vmul.f32 %v454, %v455
        %v457 = vsub.f32 %v452, %v456
        %v458 = vmul.f32 %v457, %v457
        %459 = vadd.xlane.f32.xlu0 %v458
        %v460 = vpop.xlane.xlu0 %459
        %v461 = vmul.f32 %v460, %v455
        %v462 = vadd.f32 %v461, 4e-07
        %v463 = vrsqrt.pop %v462
        %v464 = vmul.f32 %v457, %v463
        %v465 = vld [vmem:[%s3] sm:$0x1]
        %v467 = vlaneseq
        %v468 = vshrl.u32 %v467, 7
        %v469 = vsub.s32 0, %v468
        %v470 = vrot.slane %v465, %v469
        %v472 = vmul.f32 %v464, %v470
        %v473 = vld [vmem:[%s4] sm:$0x1]
        %v475 = vlaneseq
        %v476 = vshrl.u32 %v475, 7
        %v477 = vsub.s32 0, %v476
        %v478 = vrot.slane %v473, %v477
        %v480 = vadd.f32 %v472, %v478
        %v481 = vld [vmem:[%s5] sm:$0xff]
        %v482 = vld [vmem:[%s5 + $0x8] sm:$0xff]
        %v483 = vld [vmem:[%s5 + $0x10] sm:$0xff]
        %v484 = vld [vmem:[%s5 + $0x18] sm:$0xff]
        %v485 = vld [vmem:[%s5 + $0x20] sm:$0xff]
        %v486 = vld [vmem:[%s5 + $0x28] sm:$0xff]
        %v487 = vld [vmem:[%s5 + $0x30] sm:$0xff]
        %v488 = vld [vmem:[%s5 + $0x38] sm:$0xff]
        %v489 = vld [vmem:[%s5 + $0x40] sm:$0xff]
        %v490 = vld [vmem:[%s5 + $0x48] sm:$0xff]
        %v491 = vld [vmem:[%s5 + $0x50] sm:$0xff]
        %v492 = vld [vmem:[%s5 + $0x58] sm:$0xff]
        %v493 = vld [vmem:[%s5 + $0x60] sm:$0xff]
        %v494 = vld [vmem:[%s5 + $0x68] sm:$0xff]
        %v495 = vld [vmem:[%s5 + $0x70] sm:$0xff]
        %v496 = vld [vmem:[%s5 + $0x78] sm:$0xff]
        %v497 = vld [vmem:[%s6] sm:$0x1]
        %v499 = vlaneseq
        %v500 = vshrl.u32 %v499, 7
        %v501 = vsub.s32 0, %v500
        %v502 = vrot.slane %v497, %v501
        %504 = vmatprep.subr.mxu0 0.0
        %505 = vmatpush1.msra.mxu0 %v481
        %506 = vmatprep.subr.mxu0 0.0
        %507 = vmatpush1.msra.mxu0 %v482
        %508 = vmatprep.subr.mxu0 0.0
        %509 = vmatpush1.msra.mxu0 %v483
        %510 = vmatprep.subr.mxu0 0.0
        %511 = vmatpush1.msra.mxu0 %v484
        %512 = vmatprep.subr.mxu0 0.0
        %513 = vmatpush1.msra.mxu0 %v485
        %514 = vmatprep.subr.mxu0 0.0
        %515 = vmatpush1.msra.mxu0 %v486
        %516 = vmatprep.subr.mxu0 0.0
        %517 = vmatpush1.msra.mxu0 %v487
        %518 = vmatprep.subr.mxu0 0.0
        %519 = vmatpush1.msra.mxu0 %v488
        %520 = vmatprep.subr.mxu0 0.0
        %521 = vmatpush1.msra.mxu0 %v489
        %522 = vmatprep.subr.mxu0 0.0
        %523 = vmatpush1.msra.mxu0 %v490
        %524 = vmatprep.subr.mxu0 0.0
        %525 = vmatpush1.msra.mxu0 %v491
        %526 = vmatprep.subr.mxu0 0.0
        %527 = vmatpush1.msra.mxu0 %v492
        %528 = vmatprep.subr.mxu0 0.0
        %529 = vmatpush1.msra.mxu0 %v493
        %530 = vmatprep.subr.mxu0 0.0
        %531 = vmatpush1.msra.mxu0 %v494
        %532 = vmatprep.subr.mxu0 0.0
        %533 = vmatpush1.msra.mxu0 %v495
        %534 = vmatprep.subr.mxu0 0.0
        %535 = vmatpush1.msra.mxu0 %v496
        %536 = vmatprep.subr.mxu0 0.0
        %537 = vmatpush1.msra.mxu0 0.0
        %538 = vmatprep.subr.mxu0 0.0
        %539 = vmatpush1.msra.mxu0 0.0
        %540 = vmatprep.subr.mxu0 0.0
        %541 = vmatpush1.msra.mxu0 0.0
        %542 = vmatprep.subr.mxu0 0.0
        %543 = vmatpush1.msra.mxu0 0.0
        %544 = vmatprep.subr.mxu0 0.0
        %545 = vmatpush1.msra.mxu0 0.0
        %546 = vmatprep.subr.mxu0 0.0
        %547 = vmatpush1.msra.mxu0 0.0
        %548 = vmatprep.subr.mxu0 0.0
        %549 = vmatpush1.msra.mxu0 0.0
        %550 = vmatprep.subr.mxu0 0.0
        %551 = vmatpush1.msra.mxu0 0.0
        %552 = vmatprep.subr.mxu0 0.0
        %553 = vmatpush1.msra.mxu0 0.0
        %554 = vmatprep.subr.mxu0 0.0
        %555 = vmatpush1.msra.mxu0 0.0
        %556 = vmatprep.subr.mxu0 0.0
        %557 = vmatpush1.msra.mxu0 0.0
        %558 = vmatprep.subr.mxu0 0.0
        %559 = vmatpush1.msra.mxu0 0.0
        %560 = vmatprep.subr.mxu0 0.0
        %561 = vmatpush1.msra.mxu0 0.0
        %562 = vmatprep.subr.mxu0 0.0
        %563 = vmatpush1.msra.mxu0 0.0
        %564 = vmatprep.subr.mxu0 0.0
        %565 = vmatpush1.msra.mxu0 0.0
        %566 = vmatprep.subr.mxu0 0.0
        %567 = vmatpush1.msra.mxu0 0.0
        %568 = vmatprep.mubr.f32.mxu0 0.0
        %569 = vmatmul.mubr.f32.gmra.mrb[0].mxu0 %v480
        %v570 = vpop.f32.mrb[0].mxu0
        %v571 = vadd.f32 %v502, %v570
        %v572 = vpop.f32.mrb[0].mxu0
        %573 = vdwg.mxu0
        %v574 = vmul.f32 %v571, 0.5
        %v575 = vmul.f32 %v571, 0.70710677
        %v576 = verf.f32.pop %v575
        %v577 = vadd.f32 %v576, 1.0
        %v578 = vmul.f32 %v574, %v577
        %579 = vst [vmem:[%s269] sm:$0xff] %v578
        %s580 = sand.u32 %s181, 1
        %s581 = scalar_lea.sflag [#allocation3], %s580
        %s582 = sand.u32 %s181, 1
        %s583 = smul.addr %s582, 8
        %s584 = scalar_lea.vmem [#allocation2], %s583
        // Predicated region
        $region49: #{tpu_custom_call.1} parent=47 // pred_check
          %p585 = pneg %p191
        $region50: #{tpu_custom_call.1} parent=47 // pred_check_branch
          %587 = sbr.rel (%p585) target = $region52
        $region51: #{tpu_custom_call.1} parent=47 // pred_region
          %s589 = ssub.s32 128, 128
          %590 = vsyncadd %s581, %s589
          %s591 = smul.addr %s21, 128
          %s592 = scalar_lea.hbm %s7, %s591
          %s594 = sshll.u32 %s584, 4
          %s595 = int_to_ptr.vmem [resolvable:$true] %s594
          %597 = dma.vmem_to_hbm [thread:$0]  %s595, 128, %s592, %s581
        $region52: #{tpu_custom_call.1} parent=47 // pred_fallthru
          _
      $region48: #{tpu_custom_call.1} parent=5 // pred_fallthru
        _
      %p598 = scmp.le.s32.totalorder 2, %s16
      // Predicated region
      $region53: #{tpu_custom_call.1} parent=5 // pred_check
        %p599 = pneg %p598
      $region54: #{tpu_custom_call.1} parent=5 // pred_check_branch
        %601 = sbr.rel (%p599) target = $region56
      $region55: #{tpu_custom_call.1} parent=5 // pred_region
        %s602 = ssub.s32 %s16, 2
        // Predicated region
        $region57: #{tpu_custom_call.1} parent=55 // pred_check
          %p603 = pneg %p197
        $region58: #{tpu_custom_call.1} parent=55 // pred_check_branch
          %605 = sbr.rel (%p603) target = $region60
        $region59: #{tpu_custom_call.1} parent=55 // pred_region
          %s606 = sand.u32 %s182, 1
          %s607 = scalar_lea.sflag [#allocation3], %s606
          %s608 = sand.u32 %s182, 1
          %s609 = smul.addr %s608, 8
          %s610 = scalar_lea.vmem [#allocation2], %s609
          %611 = dma.done %s607, 128
        $region60: #{tpu_custom_call.1} parent=55 // pred_fallthru
          _
      $region56: #{tpu_custom_call.1} parent=5 // pred_fallthru
        _
    $region6: #{tpu_custom_call.1} parent=1 // loop_footer
      %s20 = sadd.s32 1, %s16
    $region7: #{tpu_custom_call.1} parent=1 // loop_footer_branch
      %15 = sbr.rel target = $region3
    $region8: #{tpu_custom_call.1} parent=1 // loop_exit
      _
    %612 = vsyncpa [#allocation3], 1
    %s613 = scalar_lea.sflag [#allocation3], 1
    %614 = vsyncpa %s613, 1

</llo_original>
